<compile_context>
chip_gen: v5e
topology: v5e:2x2
jax: 0.10.0
libtpu: 0.0.40
codegen_flags: <defaults>
</compile_context>

<pallas_src>
import functools

import numpy as np
import jax
import jax.numpy as jnp
from jax import lax
from jax.experimental import pallas as pl
from jax.experimental.pallas import tpu as pltpu


def encoder_layer_kernel(*refs, heads, depth, batch_block, seq_len,
                         mask_mode, compute_dtype):
    f32 = jnp.float32
    cdt = compute_dtype
    S = seq_len
    BB = batch_block

    if mask_mode == "lengths":
        lens_ref = refs[0]
        refs = refs[1:]
    else:
        lens_ref = None
    (q_ref, k_ref, v_ref,
     wq_ref, wk_ref, wv_ref, wo_ref,
     w1_ref, b1_ref, w2_ref, b2_ref,
     g1_ref, be1_ref, g2_ref, be2_ref,
     out_ref) = refs

    BS, D = q_ref.shape                       # (BB*S, 128) token slab

    # Residual copy of the slab (already f32); cast operands only for the MXU.
    q = q_ref[...].astype(f32)

    # --- Q/K/V projections: single dense K=D matmuls over the whole slab ---
    qp = jnp.dot(q.astype(cdt), wq_ref[...], preferred_element_type=f32)
    kp = jnp.dot(k_ref[...].astype(cdt), wk_ref[...], preferred_element_type=f32)
    vp = jnp.dot(v_ref[...].astype(cdt), wv_ref[...], preferred_element_type=f32)

    # Per-batch 3-D views for the attention stage (sublane-dim split, lane dim
    # untouched, so these reshapes are layout no-ops).
    qp3 = qp.reshape(BB, S, D)
    kp3 = kp.reshape(BB, S, D)
    vp3 = vp.reshape(BB, S, D)

    inv_norm = 1.0 / float(np.sqrt(depth))

    # --- additive mask bias built in-kernel from per-batch key lengths ---
    if mask_mode == "lengths":
        base = pl.program_id(0) * BB
        col = lax.broadcasted_iota(jnp.int32, (1, S), 1)       # (1, S) key index
        neg_rows = [
            jnp.where(col >= lens_ref[base + b], 1e9, 0.0).astype(f32)
            for b in range(BB)
        ]
        neg = jnp.stack(neg_rows, axis=0)                       # (BB, 1, S)
    else:
        neg = None

    # --- Multi-head attention; O-projection folded into the head loop so the
    #     per-head (BS, depth) results never need a lane concatenate.
    #     Static unroll is fine while heads is small (<=8); restructure before
    #     it starts spilling the 64-vreg file. ---
    att_o = jnp.zeros((BS, D), f32)
    for h in range(heads):
        lo = h * depth
        qh = qp3[:, :, lo:lo + depth]
        kh = kp3[:, :, lo:lo + depth]
        vh = vp3[:, :, lo:lo + depth]
        # scores over all batches of this block in one batched dot_general.
        s = jnp.einsum('bqd,bkd->bqk', qh.astype(cdt), kh.astype(cdt),
                       preferred_element_type=f32) * inv_norm
        if neg is not None:
            s = s - neg                                         # g -= mask*1e9
        m = jnp.max(s, axis=-1, keepdims=True)
        p = jnp.exp(s - m)
        denom = jnp.sum(p, axis=-1, keepdims=True)
        a = p * pl.reciprocal(denom, approx=True)               # EUP, not VPU divide
        att_h = jnp.einsum('bqk,bkd->bqd', a.astype(cdt), vh.astype(cdt),
                           preferred_element_type=f32)
        att_h = att_h.reshape(BS, depth)                        # merge leading dims
        att_o = att_o + jnp.dot(att_h.astype(cdt), wo_ref[lo:lo + depth, :],
                                preferred_element_type=f32)

    # drop1 is identity in eval mode; residual + LayerNorm 1 (rsqrt on the EUP).
    x = att_o + q
    mean = jnp.mean(x, axis=-1, keepdims=True)
    d0 = x - mean
    var = jnp.mean(d0 * d0, axis=-1, keepdims=True)
    x = g1_ref[...] * (d0 * lax.rsqrt(var + 1e-5)) + be1_ref[...]

    # --- FFN: FC1 + ReLU, FC2 (dense full-K matmuls over the whole slab) ---
    h1 = jnp.dot(x.astype(cdt), w1_ref[...], preferred_element_type=f32) + b1_ref[...]
    h1 = jnp.maximum(h1, 0.0)
    y = jnp.dot(h1.astype(cdt), w2_ref[...], preferred_element_type=f32) + b2_ref[...]

    # drop2 identity in eval; residual + LayerNorm 2.
    x = y + x
    mean = jnp.mean(x, axis=-1, keepdims=True)
    d1 = x - mean
    var = jnp.mean(d1 * d1, axis=-1, keepdims=True)
    out = g2_ref[...] * (d1 * lax.rsqrt(var + 1e-5)) + be2_ref[...]

    out_ref[...] = out.astype(out_ref.dtype)                    # lane-dense store


def encoder_layer(q, k, v, key_lengths, params, heads,
                  compute_dtype=jnp.bfloat16, batch_block=None):
    """EncoderLayer forward.

    q/k/v: (B, S, dim) float32.
    key_lengths: (B,) int32 number of valid (unmasked) keys per batch, or None
      (mask[b,i,j] = j >= key_lengths[b], applied as the -1e9 additive bias of
      the reference module).  None specializes the kernel to the no-mask case.
    batch_block: batches per grid step.  Default = B (whole batch in one step,
      best on single-TC v5e/v6e); use 1 (or B//2) on v7x so both TensorCores
      get a "parallel" grid step.
    """
    B, S, D = q.shape
    assert D % heads == 0
    depth = D // heads
    H4 = 4 * D
    cdt = compute_dtype

    if batch_block is None:
        batch_block = B
    assert B % batch_block == 0
    nblk = B // batch_block
    rows = batch_block * S                                      # slab rows per step

    mask_mode = "none" if key_lengths is None else "lengths"

    # Flatten batch into the matmul M dimension (free reshape, row-major).
    q2 = q.reshape(B * S, D).astype(jnp.float32)
    k2 = k.reshape(B * S, D).astype(jnp.float32)
    v2 = v.reshape(B * S, D).astype(jnp.float32)

    # Weights go to the MXU in compute_dtype (bf16 is MXU-native on v5e/v6e/v7x
    # and halves weight DMA + VMEM); biases / LN affine params stay f32 because
    # all element-wise math is f32 (v5e has no bf16 VPU/EUP).
    wq = params["Q"].astype(cdt)
    wk = params["K"].astype(cdt)
    wv = params["V"].astype(cdt)
    wo = params["O"].astype(cdt)
    w1 = params["fc1_w"].T.astype(cdt)                          # (D, 4D)
    w2 = params["fc2_w"].T.astype(cdt)                          # (4D, D)
    b1 = params["fc1_b"].reshape(1, H4).astype(jnp.float32)
    b2 = params["fc2_b"].reshape(1, D).astype(jnp.float32)
    g1 = params["ln1_g"].reshape(1, D).astype(jnp.float32)
    be1 = params["ln1_b"].reshape(1, D).astype(jnp.float32)
    g2 = params["ln2_g"].reshape(1, D).astype(jnp.float32)
    be2 = params["ln2_b"].reshape(1, D).astype(jnp.float32)

    kernel = functools.partial(
        encoder_layer_kernel, heads=heads, depth=depth,
        batch_block=batch_block, seq_len=S, mask_mode=mask_mode,
        compute_dtype=cdt)

    tok = lambda i, *_: (i, 0)        # token slab blocks advance with the grid
    shared = lambda i, *_: (0, 0)     # weights: constant block index (no re-DMA
                                      # needed across steps; footprint is tiny at D=128)

    in_specs = [
        pl.BlockSpec((rows, D), tok),        # q slab
        pl.BlockSpec((rows, D), tok),        # k slab
        pl.BlockSpec((rows, D), tok),        # v slab
        pl.BlockSpec((D, D), shared),        # Wq
        pl.BlockSpec((D, D), shared),        # Wk
        pl.BlockSpec((D, D), shared),        # Wv
        pl.BlockSpec((D, D), shared),        # Wo
        pl.BlockSpec((D, H4), shared),       # FC1 weight
        pl.BlockSpec((1, H4), shared),       # FC1 bias
        pl.BlockSpec((H4, D), shared),       # FC2 weight
        pl.BlockSpec((1, D), shared),        # FC2 bias
        pl.BlockSpec((1, D), shared),        # LN1 gamma
        pl.BlockSpec((1, D), shared),        # LN1 beta
        pl.BlockSpec((1, D), shared),        # LN2 gamma
        pl.BlockSpec((1, D), shared),        # LN2 beta
    ]

    args = [q2, k2, v2, wq, wk, wv, wo, w1, b1, w2, b2, g1, be1, g2, be2]
    num_prefetch = 0
    if mask_mode == "lengths":
        args = [key_lengths.astype(jnp.int32)] + args
        num_prefetch = 1

    out = pl.pallas_call(
        kernel,
        out_shape=jax.ShapeDtypeStruct((B * S, D), jnp.float32),
        grid_spec=pltpu.PrefetchScalarGridSpec(
            num_scalar_prefetch=num_prefetch,
            grid=(nblk,),
            in_specs=in_specs,
            out_specs=pl.BlockSpec((rows, D), tok),
        ),
        compiler_params=pltpu.CompilerParams(
            dimension_semantics=("parallel",)),       # batch blocks across TCs on v7x
    )(*args)
    return out.reshape(B, S, D)


def init_params(key, dim):
    """Deterministic synthetic parameters matching EncoderLayer's __init__ shapes."""
    ks = jax.random.split(key, 8)

    def uni(k, shape, bound):
        return jax.random.uniform(k, shape, jnp.float32, -bound, bound)

    xav = float(np.sqrt(6.0 / (2.0 * dim)))
    return dict(
        Q=uni(ks[0], (dim, dim), xav),
        K=uni(ks[1], (dim, dim), xav),
        V=uni(ks[2], (dim, dim), xav),
        O=uni(ks[3], (dim, dim), xav),
        fc1_w=uni(ks[4], (4 * dim, dim), float(np.sqrt(6.0 / dim))),          # kaiming relu
        fc1_b=uni(ks[5], (4 * dim,), float(1.0 / np.sqrt(dim))),
        fc2_w=uni(ks[6], (dim, 4 * dim), float(np.sqrt(6.0 / (5.0 * dim)))),  # xavier
        fc2_b=uni(ks[7], (dim,), float(1.0 / np.sqrt(4.0 * dim))),
        ln1_g=jnp.ones((dim,), jnp.float32),
        ln1_b=jnp.zeros((dim,), jnp.float32),
        ln2_g=jnp.ones((dim,), jnp.float32),
        ln2_b=jnp.zeros((dim,), jnp.float32),
    )


def _ln(x, g, b, eps=1e-5):
    m = x.mean(-1, keepdims=True)
    d = x - m
    v = (d * d).mean(-1, keepdims=True)
    return g * (d * lax.rsqrt(v + eps)) + b


def ref_forward(q, k, v, mask, p, heads):
    """Pure-JAX reference (f32, HIGHEST precision) matching the PyTorch forward."""
    hi = lax.Precision.HIGHEST
    B, S, D = q.shape
    depth = D // heads
    mm = lambda a, b: jnp.matmul(a, b, precision=hi)

    qp = mm(q, p["Q"]).reshape(B, S, heads, depth).transpose(0, 2, 1, 3)
    kp = mm(k, p["K"]).reshape(B, S, heads, depth).transpose(0, 2, 3, 1)
    vp = mm(v, p["V"]).reshape(B, S, heads, depth).transpose(0, 2, 1, 3)
    g = mm(qp, kp) / np.sqrt(depth)
    if mask is not None:
        g = g - mask[:, None, :, :] * 1e9
    A = jax.nn.softmax(g, axis=-1)
    att = mm(A, vp).transpose(0, 2, 1, 3).reshape(B, S, D)
    att = mm(att, p["O"])

    x = att + q
    x = _ln(x, p["ln1_g"], p["ln1_b"])
    d = jnp.maximum(mm(x, p["fc1_w"].T) + p["fc1_b"], 0.0)
    d = mm(d, p["fc2_w"].T) + p["fc2_b"]
    x = d + x
    return _ln(x, p["ln2_g"], p["ln2_b"])


if __name__ == "__main__":
    B, S, DIM, HEADS = 2, 16, 128, 4

    key = jax.random.PRNGKey(0)
    kq, kk, kv, kp = jax.random.split(key, 4)
    q = jax.random.normal(kq, (B, S, DIM), jnp.float32)
    k = jax.random.normal(kk, (B, S, DIM), jnp.float32)
    v = jax.random.normal(kv, (B, S, DIM), jnp.float32)

    # Padding mask: batch 0 masks the last 4 keys, batch 1 the last 6.
    lengths = jnp.array([S - 4, S - 6], jnp.int32)
    pad = (jnp.arange(S)[None, :] >= lengths[:, None]).astype(jnp.float32)   # (B, S)
    dense_mask = jnp.broadcast_to(pad[:, None, :], (B, S, S))                # ref only

    params = init_params(kp, DIM)

    fwd = jax.jit(encoder_layer,
                  static_argnames=("heads", "compute_dtype", "batch_block"))

    ref = ref_forward(q, k, v, dense_mask, params, HEADS)

    # 1) f32 MXU path, whole batch flattened into one grid step (v5e/v6e layout).
    out = jax.block_until_ready(
        fwd(q, k, v, lengths, params, heads=HEADS, compute_dtype=jnp.float32))
    assert out.shape == (B, S, DIM), out.shape
    # 5e-3 tolerance: the only approximation vs the reference is the EUP
    # approximate reciprocal in the softmax denominator.
    assert jnp.allclose(out, ref, atol=5e-3, rtol=5e-3), (
        float(jnp.max(jnp.abs(out - ref))))

    # 2) default bf16 MXU operands (all generations), f32 accumulation/epilogue.
    out_bf16 = jax.block_until_ready(fwd(q, k, v, lengths, params, heads=HEADS))
    assert jnp.allclose(out_bf16, ref, atol=1e-1, rtol=1e-1), (
        float(jnp.max(jnp.abs(out_bf16 - ref))))

    # 3) v7x-style layout: 2 "parallel" grid steps (one batch each) so both TCs work.
    out_par = jax.block_until_ready(
        fwd(q, k, v, lengths, params, heads=HEADS, compute_dtype=jnp.float32,
            batch_block=1))
    assert jnp.allclose(out_par, ref, atol=5e-3, rtol=5e-3), (
        float(jnp.max(jnp.abs(out_par - ref))))

    # 4) no-mask specialization: no (B,S,S) allocation, no mask math in-kernel.
    ref_nm = ref_forward(q, k, v, None, params, HEADS)
    out_nm = jax.block_until_ready(
        fwd(q, k, v, None, params, heads=HEADS, compute_dtype=jnp.float32))
    assert jnp.allclose(out_nm, ref_nm, atol=5e-3, rtol=5e-3), (
        float(jnp.max(jnp.abs(out_nm - ref_nm))))

    print("KERNEL_OK")
</pallas_src>

<mosaic_0001>
module attributes {stable_mosaic.version = 11 : i64} {
  func.func @encoder_layer_kernel(%arg0: i32, %arg1: memref<2xi32, #tpu.memory_space<smem>>, %arg2: memref<32x128xf32, #tpu.memory_space<vmem>>, %arg3: memref<32x128xf32, #tpu.memory_space<vmem>>, %arg4: memref<32x128xf32, #tpu.memory_space<vmem>>, %arg5: memref<128x128xf32, #tpu.memory_space<vmem>>, %arg6: memref<128x128xf32, #tpu.memory_space<vmem>>, %arg7: memref<128x128xf32, #tpu.memory_space<vmem>>, %arg8: memref<128x128xf32, #tpu.memory_space<vmem>>, %arg9: memref<128x512xf32, #tpu.memory_space<vmem>>, %arg10: memref<1x512xf32, #tpu.memory_space<vmem>>, %arg11: memref<512x128xf32, #tpu.memory_space<vmem>>, %arg12: memref<1x128xf32, #tpu.memory_space<vmem>>, %arg13: memref<1x128xf32, #tpu.memory_space<vmem>>, %arg14: memref<1x128xf32, #tpu.memory_space<vmem>>, %arg15: memref<1x128xf32, #tpu.memory_space<vmem>>, %arg16: memref<1x128xf32, #tpu.memory_space<vmem>>, %arg17: memref<32x128xf32, #tpu.memory_space<vmem>>) attributes {dimension_semantics = [#tpu.dimension_semantics<parallel>], iteration_bounds = array<i64: 1>, scalar_prefetch = 1 : i64, scratch_operands = 0 : i64, tpu.core_type = #tpu.core_type<tc>, window_params = [{transform_indices = @transform_0, window_bounds = array<i64: 32, 128>}, {transform_indices = @transform_1, window_bounds = array<i64: 32, 128>}, {transform_indices = @transform_2, window_bounds = array<i64: 32, 128>}, {pipeline_mode = #tpu.pipeline_mode<synchronous>, transform_indices = @transform_3, window_bounds = array<i64: 128, 128>}, {pipeline_mode = #tpu.pipeline_mode<synchronous>, transform_indices = @transform_4, window_bounds = array<i64: 128, 128>}, {pipeline_mode = #tpu.pipeline_mode<synchronous>, transform_indices = @transform_5, window_bounds = array<i64: 128, 128>}, {pipeline_mode = #tpu.pipeline_mode<synchronous>, transform_indices = @transform_6, window_bounds = array<i64: 128, 128>}, {pipeline_mode = #tpu.pipeline_mode<synchronous>, transform_indices = @transform_7, window_bounds = array<i64: 128, 512>}, {pipeline_mode = #tpu.pipeline_mode<synchronous>, transform_indices = @transform_8, window_bounds = array<i64: 1, 512>}, {pipeline_mode = #tpu.pipeline_mode<synchronous>, transform_indices = @transform_9, window_bounds = array<i64: 512, 128>}, {pipeline_mode = #tpu.pipeline_mode<synchronous>, transform_indices = @transform_10, window_bounds = array<i64: 1, 128>}, {pipeline_mode = #tpu.pipeline_mode<synchronous>, transform_indices = @transform_11, window_bounds = array<i64: 1, 128>}, {pipeline_mode = #tpu.pipeline_mode<synchronous>, transform_indices = @transform_12, window_bounds = array<i64: 1, 128>}, {pipeline_mode = #tpu.pipeline_mode<synchronous>, transform_indices = @transform_13, window_bounds = array<i64: 1, 128>}, {pipeline_mode = #tpu.pipeline_mode<synchronous>, transform_indices = @transform_14, window_bounds = array<i64: 1, 128>}, {transform_indices = @transform_15, window_bounds = array<i64: 32, 128>}]} {
    %c0 = arith.constant 0 : index
    %c0_0 = arith.constant 0 : index
    %0 = vector.load %arg2[%c0, %c0_0] : memref<32x128xf32, #tpu.memory_space<vmem>>, vector<32x128xf32>
    %c0_1 = arith.constant 0 : index
    %c0_2 = arith.constant 0 : index
    %1 = vector.load %arg5[%c0_1, %c0_2] : memref<128x128xf32, #tpu.memory_space<vmem>>, vector<128x128xf32>
    %cst = arith.constant dense<0.000000e+00> : vector<32x128xf32>
    %2 = tpu.matmul %0, %1, %cst {dimension_numbers = #tpu.dot_dimension_numbers<[1], [0], [0], [1], [0, 0, 1, 1], [], []>} : vector<32x128xf32>, vector<128x128xf32>, vector<32x128xf32> -> vector<32x128xf32>
    %c0_3 = arith.constant 0 : index
    %c0_4 = arith.constant 0 : index
    %3 = vector.load %arg3[%c0_3, %c0_4] : memref<32x128xf32, #tpu.memory_space<vmem>>, vector<32x128xf32>
    %c0_5 = arith.constant 0 : index
    %c0_6 = arith.constant 0 : index
    %4 = vector.load %arg6[%c0_5, %c0_6] : memref<128x128xf32, #tpu.memory_space<vmem>>, vector<128x128xf32>
    %cst_7 = arith.constant dense<0.000000e+00> : vector<32x128xf32>
    %5 = tpu.matmul %3, %4, %cst_7 {dimension_numbers = #tpu.dot_dimension_numbers<[1], [0], [0], [1], [0, 0, 1, 1], [], []>} : vector<32x128xf32>, vector<128x128xf32>, vector<32x128xf32> -> vector<32x128xf32>
    %c0_8 = arith.constant 0 : index
    %c0_9 = arith.constant 0 : index
    %6 = vector.load %arg4[%c0_8, %c0_9] : memref<32x128xf32, #tpu.memory_space<vmem>>, vector<32x128xf32>
    %c0_10 = arith.constant 0 : index
    %c0_11 = arith.constant 0 : index
    %7 = vector.load %arg7[%c0_10, %c0_11] : memref<128x128xf32, #tpu.memory_space<vmem>>, vector<128x128xf32>
    %cst_12 = arith.constant dense<0.000000e+00> : vector<32x128xf32>
    %8 = tpu.matmul %6, %7, %cst_12 {dimension_numbers = #tpu.dot_dimension_numbers<[1], [0], [0], [1], [0, 0, 1, 1], [], []>} : vector<32x128xf32>, vector<128x128xf32>, vector<32x128xf32> -> vector<32x128xf32>
    %9 = vector.shape_cast %2 : vector<32x128xf32> to vector<2x16x128xf32>
    %10 = vector.shape_cast %5 : vector<32x128xf32> to vector<2x16x128xf32>
    %11 = vector.shape_cast %8 : vector<32x128xf32> to vector<2x16x128xf32>
    %c2_i32 = arith.constant 2 : i32
    %12 = arith.muli %arg0, %c2_i32 : i32
    %13 = tpu.iota {dimensions = array<i32: 1>} : vector<1x16xi32>
    %c0_i32 = arith.constant 0 : i32
    %14 = arith.addi %12, %c0_i32 : i32
    %15 = arith.index_cast %14 : i32 to index
    %16 = memref.load %arg1[%15] : memref<2xi32, #tpu.memory_space<smem>>
    %17 = vector.broadcast %16 : i32 to vector<1x16xi32>
    %18 = arith.cmpi sge, %13, %17 : vector<1x16xi32>
    %cst_13 = arith.constant 1.000000e+09 : f32
    %cst_14 = arith.constant 0.000000e+00 : f32
    %19 = vector.broadcast %cst_13 : f32 to vector<1x16xf32>
    %20 = vector.broadcast %cst_14 : f32 to vector<1x16xf32>
    %21 = arith.select %18, %19, %20 : vector<1x16xi1>, vector<1x16xf32>
    %c1_i32 = arith.constant 1 : i32
    %22 = arith.addi %12, %c1_i32 : i32
    %23 = arith.index_cast %22 : i32 to index
    %24 = memref.load %arg1[%23] : memref<2xi32, #tpu.memory_space<smem>>
    %25 = vector.broadcast %24 : i32 to vector<1x16xi32>
    %26 = arith.cmpi sge, %13, %25 : vector<1x16xi32>
    %cst_15 = arith.constant 1.000000e+09 : f32
    %cst_16 = arith.constant 0.000000e+00 : f32
    %27 = vector.broadcast %cst_15 : f32 to vector<1x16xf32>
    %28 = vector.broadcast %cst_16 : f32 to vector<1x16xf32>
    %29 = arith.select %26, %27, %28 : vector<1x16xi1>, vector<1x16xf32>
    %30 = vector.shape_cast %21 : vector<1x16xf32> to vector<1x1x16xf32>
    %31 = vector.shape_cast %29 : vector<1x16xf32> to vector<1x1x16xf32>
    %32 = tpu.concatenate %30, %31 in 0 : vector<1x1x16xf32>, vector<1x1x16xf32> -> vector<2x1x16xf32>
    %cst_17 = arith.constant 0.000000e+00 : f32
    %33 = vector.broadcast %cst_17 : f32 to vector<32x128xf32>
    %34 = vector.extract_strided_slice %9 {offsets = [0, 0, 0], sizes = [2, 16, 32], strides = [1, 1, 1]} : vector<2x16x128xf32> to vector<2x16x32xf32>
    %35 = vector.extract_strided_slice %10 {offsets = [0, 0, 0], sizes = [2, 16, 32], strides = [1, 1, 1]} : vector<2x16x128xf32> to vector<2x16x32xf32>
    %36 = vector.extract_strided_slice %11 {offsets = [0, 0, 0], sizes = [2, 16, 32], strides = [1, 1, 1]} : vector<2x16x128xf32> to vector<2x16x32xf32>
    "tpu.trace_start"() <{level = 10 : i32, message = "bqd,bkd->bqk"}> : () -> ()
    %cst_18 = arith.constant dense<0.000000e+00> : vector<2x16x16xf32>
    %37 = tpu.matmul %34, %35, %cst_18 {dimension_numbers = #tpu.dot_dimension_numbers<[2], [2], [1], [1], [0, 0, 0, 1, 1, 1], [0], [0]>} : vector<2x16x32xf32>, vector<2x16x32xf32>, vector<2x16x16xf32> -> vector<2x16x16xf32>
    "tpu.trace_stop"() : () -> ()
    %cst_19 = arith.constant 0.176776692 : f32
    %38 = vector.broadcast %cst_19 : f32 to vector<2x16x16xf32>
    %39 = arith.mulf %37, %38 : vector<2x16x16xf32>
    %40 = vector.broadcast %32 : vector<2x1x16xf32> to vector<2x16x16xf32>
    %41 = arith.subf %39, %40 : vector<2x16x16xf32>
    %cst_20 = arith.constant dense<0xFF800000> : vector<2x16xf32>
    %42 = vector.multi_reduction <maximumf>, %41, %cst_20 [2] : vector<2x16x16xf32> to vector<2x16xf32>
    %43 = vector.shape_cast %42 : vector<2x16xf32> to vector<2x16x1xf32>
    %44 = vector.broadcast %43 : vector<2x16x1xf32> to vector<2x16x16xf32>
    %45 = arith.subf %41, %44 : vector<2x16x16xf32>
    %46 = math.exp %45 : vector<2x16x16xf32>
    %cst_21 = arith.constant dense<0.000000e+00> : vector<2x16xf32>
    %47 = vector.multi_reduction <add>, %46, %cst_21 [2] : vector<2x16x16xf32> to vector<2x16xf32>
    %48 = vector.shape_cast %47 : vector<2x16xf32> to vector<2x16x1xf32>
    %49 = tpu.reciprocal %48 {approx = true} : vector<2x16x1xf32> -> vector<2x16x1xf32>
    %50 = vector.broadcast %49 : vector<2x16x1xf32> to vector<2x16x16xf32>
    %51 = arith.mulf %46, %50 : vector<2x16x16xf32>
    "tpu.trace_start"() <{level = 10 : i32, message = "bqk,bkd->bqd"}> : () -> ()
    %cst_22 = arith.constant dense<0.000000e+00> : vector<2x16x32xf32>
    %52 = tpu.matmul %51, %36, %cst_22 {dimension_numbers = #tpu.dot_dimension_numbers<[2], [1], [1], [2], [0, 0, 0, 1, 1, 2], [0], [0]>} : vector<2x16x16xf32>, vector<2x16x32xf32>, vector<2x16x32xf32> -> vector<2x16x32xf32>
    "tpu.trace_stop"() : () -> ()
    %53 = vector.shape_cast %52 : vector<2x16x32xf32> to vector<32x32xf32>
    %c0_23 = arith.constant 0 : index
    %c0_24 = arith.constant 0 : index
    %54 = vector.load %arg8[%c0_23, %c0_24] : memref<128x128xf32, #tpu.memory_space<vmem>>, vector<32x128xf32>
    %cst_25 = arith.constant dense<0.000000e+00> : vector<32x128xf32>
    %55 = tpu.matmul %53, %54, %cst_25 {dimension_numbers = #tpu.dot_dimension_numbers<[1], [0], [0], [1], [0, 0, 1, 1], [], []>} : vector<32x32xf32>, vector<32x128xf32>, vector<32x128xf32> -> vector<32x128xf32>
    %56 = arith.addf %33, %55 : vector<32x128xf32>
    %57 = vector.extract_strided_slice %9 {offsets = [0, 0, 32], sizes = [2, 16, 32], strides = [1, 1, 1]} : vector<2x16x128xf32> to vector<2x16x32xf32>
    %58 = vector.extract_strided_slice %10 {offsets = [0, 0, 32], sizes = [2, 16, 32], strides = [1, 1, 1]} : vector<2x16x128xf32> to vector<2x16x32xf32>
    %59 = vector.extract_strided_slice %11 {offsets = [0, 0, 32], sizes = [2, 16, 32], strides = [1, 1, 1]} : vector<2x16x128xf32> to vector<2x16x32xf32>
    "tpu.trace_start"() <{level = 10 : i32, message = "bqd,bkd->bqk"}> : () -> ()
    %cst_26 = arith.constant dense<0.000000e+00> : vector<2x16x16xf32>
    %60 = tpu.matmul %57, %58, %cst_26 {dimension_numbers = #tpu.dot_dimension_numbers<[2], [2], [1], [1], [0, 0, 0, 1, 1, 1], [0], [0]>} : vector<2x16x32xf32>, vector<2x16x32xf32>, vector<2x16x16xf32> -> vector<2x16x16xf32>
    "tpu.trace_stop"() : () -> ()
    %cst_27 = arith.constant 0.176776692 : f32
    %61 = vector.broadcast %cst_27 : f32 to vector<2x16x16xf32>
    %62 = arith.mulf %60, %61 : vector<2x16x16xf32>
    %63 = vector.broadcast %32 : vector<2x1x16xf32> to vector<2x16x16xf32>
    %64 = arith.subf %62, %63 : vector<2x16x16xf32>
    %cst_28 = arith.constant dense<0xFF800000> : vector<2x16xf32>
    %65 = vector.multi_reduction <maximumf>, %64, %cst_28 [2] : vector<2x16x16xf32> to vector<2x16xf32>
    %66 = vector.shape_cast %65 : vector<2x16xf32> to vector<2x16x1xf32>
    %67 = vector.broadcast %66 : vector<2x16x1xf32> to vector<2x16x16xf32>
    %68 = arith.subf %64, %67 : vector<2x16x16xf32>
    %69 = math.exp %68 : vector<2x16x16xf32>
    %cst_29 = arith.constant dense<0.000000e+00> : vector<2x16xf32>
    %70 = vector.multi_reduction <add>, %69, %cst_29 [2] : vector<2x16x16xf32> to vector<2x16xf32>
    %71 = vector.shape_cast %70 : vector<2x16xf32> to vector<2x16x1xf32>
    %72 = tpu.reciprocal %71 {approx = true} : vector<2x16x1xf32> -> vector<2x16x1xf32>
    %73 = vector.broadcast %72 : vector<2x16x1xf32> to vector<2x16x16xf32>
    %74 = arith.mulf %69, %73 : vector<2x16x16xf32>
    "tpu.trace_start"() <{level = 10 : i32, message = "bqk,bkd->bqd"}> : () -> ()
    %cst_30 = arith.constant dense<0.000000e+00> : vector<2x16x32xf32>
    %75 = tpu.matmul %74, %59, %cst_30 {dimension_numbers = #tpu.dot_dimension_numbers<[2], [1], [1], [2], [0, 0, 0, 1, 1, 2], [0], [0]>} : vector<2x16x16xf32>, vector<2x16x32xf32>, vector<2x16x32xf32> -> vector<2x16x32xf32>
    "tpu.trace_stop"() : () -> ()
    %76 = vector.shape_cast %75 : vector<2x16x32xf32> to vector<32x32xf32>
    %c32 = arith.constant 32 : index
    %c0_31 = arith.constant 0 : index
    %77 = vector.load %arg8[%c32, %c0_31] : memref<128x128xf32, #tpu.memory_space<vmem>>, vector<32x128xf32>
    %cst_32 = arith.constant dense<0.000000e+00> : vector<32x128xf32>
    %78 = tpu.matmul %76, %77, %cst_32 {dimension_numbers = #tpu.dot_dimension_numbers<[1], [0], [0], [1], [0, 0, 1, 1], [], []>} : vector<32x32xf32>, vector<32x128xf32>, vector<32x128xf32> -> vector<32x128xf32>
    %79 = arith.addf %56, %78 : vector<32x128xf32>
    %80 = vector.extract_strided_slice %9 {offsets = [0, 0, 64], sizes = [2, 16, 32], strides = [1, 1, 1]} : vector<2x16x128xf32> to vector<2x16x32xf32>
    %81 = vector.extract_strided_slice %10 {offsets = [0, 0, 64], sizes = [2, 16, 32], strides = [1, 1, 1]} : vector<2x16x128xf32> to vector<2x16x32xf32>
    %82 = vector.extract_strided_slice %11 {offsets = [0, 0, 64], sizes = [2, 16, 32], strides = [1, 1, 1]} : vector<2x16x128xf32> to vector<2x16x32xf32>
    "tpu.trace_start"() <{level = 10 : i32, message = "bqd,bkd->bqk"}> : () -> ()
    %cst_33 = arith.constant dense<0.000000e+00> : vector<2x16x16xf32>
    %83 = tpu.matmul %80, %81, %cst_33 {dimension_numbers = #tpu.dot_dimension_numbers<[2], [2], [1], [1], [0, 0, 0, 1, 1, 1], [0], [0]>} : vector<2x16x32xf32>, vector<2x16x32xf32>, vector<2x16x16xf32> -> vector<2x16x16xf32>
    "tpu.trace_stop"() : () -> ()
    %cst_34 = arith.constant 0.176776692 : f32
    %84 = vector.broadcast %cst_34 : f32 to vector<2x16x16xf32>
    %85 = arith.mulf %83, %84 : vector<2x16x16xf32>
    %86 = vector.broadcast %32 : vector<2x1x16xf32> to vector<2x16x16xf32>
    %87 = arith.subf %85, %86 : vector<2x16x16xf32>
    %cst_35 = arith.constant dense<0xFF800000> : vector<2x16xf32>
    %88 = vector.multi_reduction <maximumf>, %87, %cst_35 [2] : vector<2x16x16xf32> to vector<2x16xf32>
    %89 = vector.shape_cast %88 : vector<2x16xf32> to vector<2x16x1xf32>
    %90 = vector.broadcast %89 : vector<2x16x1xf32> to vector<2x16x16xf32>
    %91 = arith.subf %87, %90 : vector<2x16x16xf32>
    %92 = math.exp %91 : vector<2x16x16xf32>
    %cst_36 = arith.constant dense<0.000000e+00> : vector<2x16xf32>
    %93 = vector.multi_reduction <add>, %92, %cst_36 [2] : vector<2x16x16xf32> to vector<2x16xf32>
    %94 = vector.shape_cast %93 : vector<2x16xf32> to vector<2x16x1xf32>
    %95 = tpu.reciprocal %94 {approx = true} : vector<2x16x1xf32> -> vector<2x16x1xf32>
    %96 = vector.broadcast %95 : vector<2x16x1xf32> to vector<2x16x16xf32>
    %97 = arith.mulf %92, %96 : vector<2x16x16xf32>
    "tpu.trace_start"() <{level = 10 : i32, message = "bqk,bkd->bqd"}> : () -> ()
    %cst_37 = arith.constant dense<0.000000e+00> : vector<2x16x32xf32>
    %98 = tpu.matmul %97, %82, %cst_37 {dimension_numbers = #tpu.dot_dimension_numbers<[2], [1], [1], [2], [0, 0, 0, 1, 1, 2], [0], [0]>} : vector<2x16x16xf32>, vector<2x16x32xf32>, vector<2x16x32xf32> -> vector<2x16x32xf32>
    "tpu.trace_stop"() : () -> ()
    %99 = vector.shape_cast %98 : vector<2x16x32xf32> to vector<32x32xf32>
    %c64 = arith.constant 64 : index
    %c0_38 = arith.constant 0 : index
    %100 = vector.load %arg8[%c64, %c0_38] : memref<128x128xf32, #tpu.memory_space<vmem>>, vector<32x128xf32>
    %cst_39 = arith.constant dense<0.000000e+00> : vector<32x128xf32>
    %101 = tpu.matmul %99, %100, %cst_39 {dimension_numbers = #tpu.dot_dimension_numbers<[1], [0], [0], [1], [0, 0, 1, 1], [], []>} : vector<32x32xf32>, vector<32x128xf32>, vector<32x128xf32> -> vector<32x128xf32>
    %102 = arith.addf %79, %101 : vector<32x128xf32>
    %103 = vector.extract_strided_slice %9 {offsets = [0, 0, 96], sizes = [2, 16, 32], strides = [1, 1, 1]} : vector<2x16x128xf32> to vector<2x16x32xf32>
    %104 = vector.extract_strided_slice %10 {offsets = [0, 0, 96], sizes = [2, 16, 32], strides = [1, 1, 1]} : vector<2x16x128xf32> to vector<2x16x32xf32>
    %105 = vector.extract_strided_slice %11 {offsets = [0, 0, 96], sizes = [2, 16, 32], strides = [1, 1, 1]} : vector<2x16x128xf32> to vector<2x16x32xf32>
    "tpu.trace_start"() <{level = 10 : i32, message = "bqd,bkd->bqk"}> : () -> ()
    %cst_40 = arith.constant dense<0.000000e+00> : vector<2x16x16xf32>
    %106 = tpu.matmul %103, %104, %cst_40 {dimension_numbers = #tpu.dot_dimension_numbers<[2], [2], [1], [1], [0, 0, 0, 1, 1, 1], [0], [0]>} : vector<2x16x32xf32>, vector<2x16x32xf32>, vector<2x16x16xf32> -> vector<2x16x16xf32>
    "tpu.trace_stop"() : () -> ()
    %cst_41 = arith.constant 0.176776692 : f32
    %107 = vector.broadcast %cst_41 : f32 to vector<2x16x16xf32>
    %108 = arith.mulf %106, %107 : vector<2x16x16xf32>
    %109 = vector.broadcast %32 : vector<2x1x16xf32> to vector<2x16x16xf32>
    %110 = arith.subf %108, %109 : vector<2x16x16xf32>
    %cst_42 = arith.constant dense<0xFF800000> : vector<2x16xf32>
    %111 = vector.multi_reduction <maximumf>, %110, %cst_42 [2] : vector<2x16x16xf32> to vector<2x16xf32>
    %112 = vector.shape_cast %111 : vector<2x16xf32> to vector<2x16x1xf32>
    %113 = vector.broadcast %112 : vector<2x16x1xf32> to vector<2x16x16xf32>
    %114 = arith.subf %110, %113 : vector<2x16x16xf32>
    %115 = math.exp %114 : vector<2x16x16xf32>
    %cst_43 = arith.constant dense<0.000000e+00> : vector<2x16xf32>
    %116 = vector.multi_reduction <add>, %115, %cst_43 [2] : vector<2x16x16xf32> to vector<2x16xf32>
    %117 = vector.shape_cast %116 : vector<2x16xf32> to vector<2x16x1xf32>
    %118 = tpu.reciprocal %117 {approx = true} : vector<2x16x1xf32> -> vector<2x16x1xf32>
    %119 = vector.broadcast %118 : vector<2x16x1xf32> to vector<2x16x16xf32>
    %120 = arith.mulf %115, %119 : vector<2x16x16xf32>
    "tpu.trace_start"() <{level = 10 : i32, message = "bqk,bkd->bqd"}> : () -> ()
    %cst_44 = arith.constant dense<0.000000e+00> : vector<2x16x32xf32>
    %121 = tpu.matmul %120, %105, %cst_44 {dimension_numbers = #tpu.dot_dimension_numbers<[2], [1], [1], [2], [0, 0, 0, 1, 1, 2], [0], [0]>} : vector<2x16x16xf32>, vector<2x16x32xf32>, vector<2x16x32xf32> -> vector<2x16x32xf32>
    "tpu.trace_stop"() : () -> ()
    %122 = vector.shape_cast %121 : vector<2x16x32xf32> to vector<32x32xf32>
    %c96 = arith.constant 96 : index
    %c0_45 = arith.constant 0 : index
    %123 = vector.load %arg8[%c96, %c0_45] : memref<128x128xf32, #tpu.memory_space<vmem>>, vector<32x128xf32>
    %cst_46 = arith.constant dense<0.000000e+00> : vector<32x128xf32>
    %124 = tpu.matmul %122, %123, %cst_46 {dimension_numbers = #tpu.dot_dimension_numbers<[1], [0], [0], [1], [0, 0, 1, 1], [], []>} : vector<32x32xf32>, vector<32x128xf32>, vector<32x128xf32> -> vector<32x128xf32>
    %125 = arith.addf %102, %124 : vector<32x128xf32>
    %126 = arith.addf %125, %0 : vector<32x128xf32>
    %cst_47 = arith.constant dense<0.000000e+00> : vector<32xf32>
    %127 = vector.multi_reduction <add>, %126, %cst_47 [1] : vector<32x128xf32> to vector<32xf32>
    %128 = vector.shape_cast %127 : vector<32xf32> to vector<32x1xf32>
    %cst_48 = arith.constant 1.280000e+02 : f32
    %129 = vector.broadcast %cst_48 : f32 to vector<32x1xf32>
    %130 = arith.divf %128, %129 : vector<32x1xf32>
    %131 = vector.broadcast %130 : vector<32x1xf32> to vector<32x128xf32>
    %132 = arith.subf %126, %131 : vector<32x128xf32>
    %133 = arith.mulf %132, %132 : vector<32x128xf32>
    %cst_49 = arith.constant dense<0.000000e+00> : vector<32xf32>
    %134 = vector.multi_reduction <add>, %133, %cst_49 [1] : vector<32x128xf32> to vector<32xf32>
    %135 = vector.shape_cast %134 : vector<32xf32> to vector<32x1xf32>
    %cst_50 = arith.constant 1.280000e+02 : f32
    %136 = vector.broadcast %cst_50 : f32 to vector<32x1xf32>
    %137 = arith.divf %135, %136 : vector<32x1xf32>
    %c0_51 = arith.constant 0 : index
    %c0_52 = arith.constant 0 : index
    %138 = vector.load %arg13[%c0_51, %c0_52] : memref<1x128xf32, #tpu.memory_space<vmem>>, vector<1x128xf32>
    %cst_53 = arith.constant 9.99999974E-6 : f32
    %139 = vector.broadcast %cst_53 : f32 to vector<32x1xf32>
    %140 = arith.addf %137, %139 : vector<32x1xf32>
    %141 = math.rsqrt %140 : vector<32x1xf32>
    %142 = vector.broadcast %141 : vector<32x1xf32> to vector<32x128xf32>
    %143 = arith.mulf %132, %142 : vector<32x128xf32>
    %144 = vector.broadcast %138 : vector<1x128xf32> to vector<32x128xf32>
    %145 = arith.mulf %144, %143 : vector<32x128xf32>
    %c0_54 = arith.constant 0 : index
    %c0_55 = arith.constant 0 : index
    %146 = vector.load %arg14[%c0_54, %c0_55] : memref<1x128xf32, #tpu.memory_space<vmem>>, vector<1x128xf32>
    %147 = vector.broadcast %146 : vector<1x128xf32> to vector<32x128xf32>
    %148 = arith.addf %145, %147 : vector<32x128xf32>
    %c0_56 = arith.constant 0 : index
    %c0_57 = arith.constant 0 : index
    %149 = vector.load %arg9[%c0_56, %c0_57] : memref<128x512xf32, #tpu.memory_space<vmem>>, vector<128x512xf32>
    %cst_58 = arith.constant dense<0.000000e+00> : vector<32x512xf32>
    %150 = tpu.matmul %148, %149, %cst_58 {dimension_numbers = #tpu.dot_dimension_numbers<[1], [0], [0], [1], [0, 0, 1, 1], [], []>} : vector<32x128xf32>, vector<128x512xf32>, vector<32x512xf32> -> vector<32x512xf32>
    %c0_59 = arith.constant 0 : index
    %c0_60 = arith.constant 0 : index
    %151 = vector.load %arg10[%c0_59, %c0_60] : memref<1x512xf32, #tpu.memory_space<vmem>>, vector<1x512xf32>
    %152 = vector.broadcast %151 : vector<1x512xf32> to vector<32x512xf32>
    %153 = arith.addf %150, %152 : vector<32x512xf32>
    %cst_61 = arith.constant 0.000000e+00 : f32
    %154 = vector.broadcast %cst_61 : f32 to vector<32x512xf32>
    %155 = arith.maximumf %153, %154 : vector<32x512xf32>
    %c0_62 = arith.constant 0 : index
    %c0_63 = arith.constant 0 : index
    %156 = vector.load %arg11[%c0_62, %c0_63] : memref<512x128xf32, #tpu.memory_space<vmem>>, vector<512x128xf32>
    %cst_64 = arith.constant dense<0.000000e+00> : vector<32x128xf32>
    %157 = tpu.matmul %155, %156, %cst_64 {dimension_numbers = #tpu.dot_dimension_numbers<[1], [0], [0], [1], [0, 0, 1, 1], [], []>} : vector<32x512xf32>, vector<512x128xf32>, vector<32x128xf32> -> vector<32x128xf32>
    %c0_65 = arith.constant 0 : index
    %c0_66 = arith.constant 0 : index
    %158 = vector.load %arg12[%c0_65, %c0_66] : memref<1x128xf32, #tpu.memory_space<vmem>>, vector<1x128xf32>
    %159 = vector.broadcast %158 : vector<1x128xf32> to vector<32x128xf32>
    %160 = arith.addf %157, %159 : vector<32x128xf32>
    %161 = arith.addf %160, %148 : vector<32x128xf32>
    %cst_67 = arith.constant dense<0.000000e+00> : vector<32xf32>
    %162 = vector.multi_reduction <add>, %161, %cst_67 [1] : vector<32x128xf32> to vector<32xf32>
    %163 = vector.shape_cast %162 : vector<32xf32> to vector<32x1xf32>
    %cst_68 = arith.constant 1.280000e+02 : f32
    %164 = vector.broadcast %cst_68 : f32 to vector<32x1xf32>
    %165 = arith.divf %163, %164 : vector<32x1xf32>
    %166 = vector.broadcast %165 : vector<32x1xf32> to vector<32x128xf32>
    %167 = arith.subf %161, %166 : vector<32x128xf32>
    %168 = arith.mulf %167, %167 : vector<32x128xf32>
    %cst_69 = arith.constant dense<0.000000e+00> : vector<32xf32>
    %169 = vector.multi_reduction <add>, %168, %cst_69 [1] : vector<32x128xf32> to vector<32xf32>
    %170 = vector.shape_cast %169 : vector<32xf32> to vector<32x1xf32>
    %cst_70 = arith.constant 1.280000e+02 : f32
    %171 = vector.broadcast %cst_70 : f32 to vector<32x1xf32>
    %172 = arith.divf %170, %171 : vector<32x1xf32>
    %c0_71 = arith.constant 0 : index
    %c0_72 = arith.constant 0 : index
    %173 = vector.load %arg15[%c0_71, %c0_72] : memref<1x128xf32, #tpu.memory_space<vmem>>, vector<1x128xf32>
    %cst_73 = arith.constant 9.99999974E-6 : f32
    %174 = vector.broadcast %cst_73 : f32 to vector<32x1xf32>
    %175 = arith.addf %172, %174 : vector<32x1xf32>
    %176 = math.rsqrt %175 : vector<32x1xf32>
    %177 = vector.broadcast %176 : vector<32x1xf32> to vector<32x128xf32>
    %178 = arith.mulf %167, %177 : vector<32x128xf32>
    %179 = vector.broadcast %173 : vector<1x128xf32> to vector<32x128xf32>
    %180 = arith.mulf %179, %178 : vector<32x128xf32>
    %c0_74 = arith.constant 0 : index
    %c0_75 = arith.constant 0 : index
    %181 = vector.load %arg16[%c0_74, %c0_75] : memref<1x128xf32, #tpu.memory_space<vmem>>, vector<1x128xf32>
    %182 = vector.broadcast %181 : vector<1x128xf32> to vector<32x128xf32>
    %183 = arith.addf %180, %182 : vector<32x128xf32>
    %c0_76 = arith.constant 0 : index
    %c0_77 = arith.constant 0 : index
    %184 = vector.load %arg17[%c0_76, %c0_77] : memref<32x128xf32, #tpu.memory_space<vmem>>, vector<32x128xf32>
    tpu.vector_store %arg17[%c0_76, %c0_77], %183 {strides = array<i32>} : memref<32x128xf32, #tpu.memory_space<vmem>>, vector<32x128xf32>,
    return
  }
  func.func @transform_0(%arg0: i32, %arg1: memref<2xi32, #tpu.memory_space<smem>>) -> (i32, i32) {
    %c0_i32 = arith.constant 0 : i32
    %c0_i32_0 = arith.constant 0 : i32
    return %arg0, %c0_i32 : i32, i32
  }
  func.func @transform_1(%arg0: i32, %arg1: memref<2xi32, #tpu.memory_space<smem>>) -> (i32, i32) {
    %c0_i32 = arith.constant 0 : i32
    %c0_i32_0 = arith.constant 0 : i32
    return %arg0, %c0_i32 : i32, i32
  }
  func.func @transform_2(%arg0: i32, %arg1: memref<2xi32, #tpu.memory_space<smem>>) -> (i32, i32) {
    %c0_i32 = arith.constant 0 : i32
    %c0_i32_0 = arith.constant 0 : i32
    return %arg0, %c0_i32 : i32, i32
  }
  func.func @transform_3(%arg0: i32, %arg1: memref<2xi32, #tpu.memory_space<smem>>) -> (i32, i32) {
    %c0_i32 = arith.constant 0 : i32
    %c0_i32_0 = arith.constant 0 : i32
    %c0_i32_1 = arith.constant 0 : i32
    return %c0_i32, %c0_i32_0 : i32, i32
  }
  func.func @transform_4(%arg0: i32, %arg1: memref<2xi32, #tpu.memory_space<smem>>) -> (i32, i32) {
    %c0_i32 = arith.constant 0 : i32
    %c0_i32_0 = arith.constant 0 : i32
    %c0_i32_1 = arith.constant 0 : i32
    return %c0_i32, %c0_i32_0 : i32, i32
  }
  func.func @transform_5(%arg0: i32, %arg1: memref<2xi32, #tpu.memory_space<smem>>) -> (i32, i32) {
    %c0_i32 = arith.constant 0 : i32
    %c0_i32_0 = arith.constant 0 : i32
    %c0_i32_1 = arith.constant 0 : i32
    return %c0_i32, %c0_i32_0 : i32, i32
  }
  func.func @transform_6(%arg0: i32, %arg1: memref<2xi32, #tpu.memory_space<smem>>) -> (i32, i32) {
    %c0_i32 = arith.constant 0 : i32
    %c0_i32_0 = arith.constant 0 : i32
    %c0_i32_1 = arith.constant 0 : i32
    return %c0_i32, %c0_i32_0 : i32, i32
  }
  func.func @transform_7(%arg0: i32, %arg1: memref<2xi32, #tpu.memory_space<smem>>) -> (i32, i32) {
    %c0_i32 = arith.constant 0 : i32
    %c0_i32_0 = arith.constant 0 : i32
    %c0_i32_1 = arith.constant 0 : i32
    return %c0_i32, %c0_i32_0 : i32, i32
  }
  func.func @transform_8(%arg0: i32, %arg1: memref<2xi32, #tpu.memory_space<smem>>) -> (i32, i32) {
    %c0_i32 = arith.constant 0 : i32
    %c0_i32_0 = arith.constant 0 : i32
    %c0_i32_1 = arith.constant 0 : i32
    return %c0_i32, %c0_i32_0 : i32, i32
  }
  func.func @transform_9(%arg0: i32, %arg1: memref<2xi32, #tpu.memory_space<smem>>) -> (i32, i32) {
    %c0_i32 = arith.constant 0 : i32
    %c0_i32_0 = arith.constant 0 : i32
    %c0_i32_1 = arith.constant 0 : i32
    return %c0_i32, %c0_i32_0 : i32, i32
  }
  func.func @transform_10(%arg0: i32, %arg1: memref<2xi32, #tpu.memory_space<smem>>) -> (i32, i32) {
    %c0_i32 = arith.constant 0 : i32
    %c0_i32_0 = arith.constant 0 : i32
    %c0_i32_1 = arith.constant 0 : i32
    return %c0_i32, %c0_i32_0 : i32, i32
  }
  func.func @transform_11(%arg0: i32, %arg1: memref<2xi32, #tpu.memory_space<smem>>) -> (i32, i32) {
    %c0_i32 = arith.constant 0 : i32
    %c0_i32_0 = arith.constant 0 : i32
    %c0_i32_1 = arith.constant 0 : i32
    return %c0_i32, %c0_i32_0 : i32, i32
  }
  func.func @transform_12(%arg0: i32, %arg1: memref<2xi32, #tpu.memory_space<smem>>) -> (i32, i32) {
    %c0_i32 = arith.constant 0 : i32
    %c0_i32_0 = arith.constant 0 : i32
    %c0_i32_1 = arith.constant 0 : i32
    return %c0_i32, %c0_i32_0 : i32, i32
  }
  func.func @transform_13(%arg0: i32, %arg1: memref<2xi32, #tpu.memory_space<smem>>) -> (i32, i32) {
    %c0_i32 = arith.constant 0 : i32
    %c0_i32_0 = arith.constant 0 : i32
    %c0_i32_1 = arith.constant 0 : i32
    return %c0_i32, %c0_i32_0 : i32, i32
  }
  func.func @transform_14(%arg0: i32, %arg1: memref<2xi32, #tpu.memory_space<smem>>) -> (i32, i32) {
    %c0_i32 = arith.constant 0 : i32
    %c0_i32_0 = arith.constant 0 : i32
    %c0_i32_1 = arith.constant 0 : i32
    return %c0_i32, %c0_i32_0 : i32, i32
  }
  func.func @transform_15(%arg0: i32, %arg1: memref<2xi32, #tpu.memory_space<smem>>) -> (i32, i32) {
    %c0_i32 = arith.constant 0 : i32
    %c0_i32_0 = arith.constant 0 : i32
    return %arg0, %c0_i32 : i32, i32
  }
}

</mosaic_0001>

<llo_original>
// kernel: encoder_layer.1
$region0: #{encoder_layer.1}
  #allocation0 [shape = 'u32[]', space=smem, size = 0x4, offset = 0x4, fixed_abs, tag = 'smem constant byte address 0x4 - core index']
  #allocation1 [shape = 'u32[72,128]{1,0:T(1,128)}', space=vmem, size = 0x9000, scoped, tag = 'internal scratch']
  #allocation2 [shape = 's32[1]{0}', space=sflag, size = 0x4, scoped, tag = 'scoped memory for encoder_layer.1']
  #allocation3 [shape = 'u8[512]{0}', space=smem, size = 0x200, scoped, tag = 'prefetched SMEM operand 0']
  %s0 = inlined_call_operand.vmem [shape: s32[2], index: 0, kind: input, shape index: {}]
  %s1 = inlined_call_operand.vmem [shape: f32[32,128], index: 1, kind: input, shape index: {}]
  %s2 = inlined_call_operand.vmem [shape: f32[32,128], index: 2, kind: input, shape index: {}]
  %s3 = inlined_call_operand.vmem [shape: f32[32,128], index: 3, kind: input, shape index: {}]
  %s4 = inlined_call_operand.vmem [shape: f32[128,128], index: 4, kind: input, shape index: {}]
  %s5 = inlined_call_operand.vmem [shape: f32[128,128], index: 5, kind: input, shape index: {}]
  %s6 = inlined_call_operand.vmem [shape: f32[128,128], index: 6, kind: input, shape index: {}]
  %s7 = inlined_call_operand.vmem [shape: f32[128,128], index: 7, kind: input, shape index: {}]
  %s8 = inlined_call_operand.vmem [shape: f32[128,512], index: 8, kind: input, shape index: {}]
  %s9 = inlined_call_operand.vmem [shape: f32[1,512], index: 9, kind: input, shape index: {}]
  %s10 = inlined_call_operand.vmem [shape: f32[512,128], index: 10, kind: input, shape index: {}]
  %s11 = inlined_call_operand.vmem [shape: f32[1,128], index: 11, kind: input, shape index: {}]
  %s12 = inlined_call_operand.vmem [shape: f32[1,128], index: 12, kind: input, shape index: {}]
  %s13 = inlined_call_operand.vmem [shape: f32[1,128], index: 13, kind: input, shape index: {}]
  %s14 = inlined_call_operand.vmem [shape: f32[1,128], index: 14, kind: input, shape index: {}]
  %s15 = inlined_call_operand.vmem [shape: f32[1,128], index: 15, kind: input, shape index: {}]
  %s16 = inlined_call_operand.hbm [shape: f32[32,128], index: 16, kind: output, shape index: {}]
  %s17 = sld [smem:[#allocation0]]
  $region70: #{encoder_layer.1} parent=0
    _
  %s19 = ssub.s32 1, %s17
  %s20 = scalar_select 0, %s19, %s17
  %s22 = sshll.u32 %s0, 4
  %s23 = int_to_ptr.vmem [resolvable:$true] %s22
  %25 = dma.vmem_to_smem %s23, 16, [#allocation3], [#allocation2]
  %27 = dma.done [#allocation2], 16
  %28 = sfence
  $region1: #{encoder_layer.1} parent=0
    #allocation4 [shape = 'u8[16384]{0}', space=vmem, size = 0x4000, scoped, tag = 'output window, operand 0, single buffered']
    #allocation5 [shape = 's32[1]{0}', space=sflag, size = 0x4, scoped, tag = 'scoped memory for encoder_layer.1']
    %29 = vsyncpa [#allocation5], 0
    // Predicated region
    $region2: #{encoder_layer.1} parent=1 // pred_check
      _
    $region3: #{encoder_layer.1} parent=1 // pred_check_branch
      %31 = sbr.rel (0) target = $region5
    $region4: #{encoder_layer.1} parent=1 // pred_region
      _
    $region5: #{encoder_layer.1} parent=1 // pred_fallthru
      _
    // Predicated region
    $region6: #{encoder_layer.1} parent=1 // pred_check
      _
    $region7: #{encoder_layer.1} parent=1 // pred_check_branch
      %33 = sbr.rel (0) target = $region9
    $region8: #{encoder_layer.1} parent=1 // pred_region
      _
    $region9: #{encoder_layer.1} parent=1 // pred_fallthru
      _
    // Predicated region
    $region10: #{encoder_layer.1} parent=1 // pred_check
      _
    $region11: #{encoder_layer.1} parent=1 // pred_check_branch
      %35 = sbr.rel (0) target = $region13
    $region12: #{encoder_layer.1} parent=1 // pred_region
      _
    $region13: #{encoder_layer.1} parent=1 // pred_fallthru
      _
    // Predicated region
    $region14: #{encoder_layer.1} parent=1 // pred_check
      _
    $region15: #{encoder_layer.1} parent=1 // pred_check_branch
      %37 = sbr.rel (0) target = $region17
    $region16: #{encoder_layer.1} parent=1 // pred_region
      _
    $region17: #{encoder_layer.1} parent=1 // pred_fallthru
      _
    // Predicated region
    $region18: #{encoder_layer.1} parent=1 // pred_check
      _
    $region19: #{encoder_layer.1} parent=1 // pred_check_branch
      %39 = sbr.rel (0) target = $region21
    $region20: #{encoder_layer.1} parent=1 // pred_region
      _
    $region21: #{encoder_layer.1} parent=1 // pred_fallthru
      _
    // Predicated region
    $region22: #{encoder_layer.1} parent=1 // pred_check
      _
    $region23: #{encoder_layer.1} parent=1 // pred_check_branch
      %41 = sbr.rel (0) target = $region25
    $region24: #{encoder_layer.1} parent=1 // pred_region
      _
    $region25: #{encoder_layer.1} parent=1 // pred_fallthru
      _
    // Predicated region
    $region26: #{encoder_layer.1} parent=1 // pred_check
      _
    $region27: #{encoder_layer.1} parent=1 // pred_check_branch
      %43 = sbr.rel (0) target = $region29
    $region28: #{encoder_layer.1} parent=1 // pred_region
      _
    $region29: #{encoder_layer.1} parent=1 // pred_fallthru
      _
    // Predicated region
    $region30: #{encoder_layer.1} parent=1 // pred_check
      _
    $region31: #{encoder_layer.1} parent=1 // pred_check_branch
      %45 = sbr.rel (0) target = $region33
    $region32: #{encoder_layer.1} parent=1 // pred_region
      _
    $region33: #{encoder_layer.1} parent=1 // pred_fallthru
      _
    // Predicated region
    $region34: #{encoder_layer.1} parent=1 // pred_check
      _
    $region35: #{encoder_layer.1} parent=1 // pred_check_branch
      %47 = sbr.rel (0) target = $region37
    $region36: #{encoder_layer.1} parent=1 // pred_region
      _
    $region37: #{encoder_layer.1} parent=1 // pred_fallthru
      _
    // Predicated region
    $region38: #{encoder_layer.1} parent=1 // pred_check
      _
    $region39: #{encoder_layer.1} parent=1 // pred_check_branch
      %49 = sbr.rel (0) target = $region41
    $region40: #{encoder_layer.1} parent=1 // pred_region
      _
    $region41: #{encoder_layer.1} parent=1 // pred_fallthru
      _
    // Predicated region
    $region42: #{encoder_layer.1} parent=1 // pred_check
      _
    $region43: #{encoder_layer.1} parent=1 // pred_check_branch
      %51 = sbr.rel (0) target = $region45
    $region44: #{encoder_layer.1} parent=1 // pred_region
      _
    $region45: #{encoder_layer.1} parent=1 // pred_fallthru
      _
    // Predicated region
    $region46: #{encoder_layer.1} parent=1 // pred_check
      _
    $region47: #{encoder_layer.1} parent=1 // pred_check_branch
      %53 = sbr.rel (0) target = $region49
    $region48: #{encoder_layer.1} parent=1 // pred_region
      _
    $region49: #{encoder_layer.1} parent=1 // pred_fallthru
      _
    // Predicated region
    $region50: #{encoder_layer.1} parent=1 // pred_check
      _
    $region51: #{encoder_layer.1} parent=1 // pred_check_branch
      %55 = sbr.rel (0) target = $region53
    $region52: #{encoder_layer.1} parent=1 // pred_region
      _
    $region53: #{encoder_layer.1} parent=1 // pred_fallthru
      _
    // Predicated region
    $region54: #{encoder_layer.1} parent=1 // pred_check
      _
    $region55: #{encoder_layer.1} parent=1 // pred_check_branch
      %57 = sbr.rel (0) target = $region57
    $region56: #{encoder_layer.1} parent=1 // pred_region
      _
    $region57: #{encoder_layer.1} parent=1 // pred_fallthru
      _
    // Predicated region
    $region58: #{encoder_layer.1} parent=1 // pred_check
      _
    $region59: #{encoder_layer.1} parent=1 // pred_check_branch
      %59 = sbr.rel (0) target = $region61
    $region60: #{encoder_layer.1} parent=1 // pred_region
      _
    $region61: #{encoder_layer.1} parent=1 // pred_fallthru
      _
    %v60 = vld [vmem:[%s1] sm:$0xff]
    %v61 = vld [vmem:[%s1 + $0x8] sm:$0xff]
    %v62 = vld [vmem:[%s1 + $0x10] sm:$0xff]
    %v63 = vld [vmem:[%s1 + $0x18] sm:$0xff]
    %v64 = vld [vmem:[%s4] sm:$0xff]
    %v65 = vld [vmem:[%s4 + $0x8] sm:$0xff]
    %v66 = vld [vmem:[%s4 + $0x10] sm:$0xff]
    %v67 = vld [vmem:[%s4 + $0x18] sm:$0xff]
    %v68 = vld [vmem:[%s4 + $0x20] sm:$0xff]
    %v69 = vld [vmem:[%s4 + $0x28] sm:$0xff]
    %v70 = vld [vmem:[%s4 + $0x30] sm:$0xff]
    %v71 = vld [vmem:[%s4 + $0x38] sm:$0xff]
    %v72 = vld [vmem:[%s4 + $0x40] sm:$0xff]
    %v73 = vld [vmem:[%s4 + $0x48] sm:$0xff]
    %v74 = vld [vmem:[%s4 + $0x50] sm:$0xff]
    %v75 = vld [vmem:[%s4 + $0x58] sm:$0xff]
    %v76 = vld [vmem:[%s4 + $0x60] sm:$0xff]
    %v77 = vld [vmem:[%s4 + $0x68] sm:$0xff]
    %v78 = vld [vmem:[%s4 + $0x70] sm:$0xff]
    %v79 = vld [vmem:[%s4 + $0x78] sm:$0xff]
    %80 = vmatpush.msra.mxu0 %v79
    %81 = vmatpush.msra.mxu0 %v78
    %82 = vmatpush.msra.mxu0 %v77
    %83 = vmatpush.msra.mxu0 %v76
    %84 = vmatpush.msra.mxu0 %v75
    %85 = vmatpush.msra.mxu0 %v74
    %86 = vmatpush.msra.mxu0 %v73
    %87 = vmatpush.msra.mxu0 %v72
    %88 = vmatpush.msra.mxu0 %v71
    %89 = vmatpush.msra.mxu0 %v70
    %90 = vmatpush.msra.mxu0 %v69
    %91 = vmatpush.msra.mxu0 %v68
    %92 = vmatpush.msra.mxu0 %v67
    %93 = vmatpush.msra.mxu0 %v66
    %94 = vmatpush.msra.mxu0 %v65
    %95 = vmatpush.msra.mxu0 %v64
    %96 = vmatmul.f32.gmra.mxu0 %v60
    %v97 = vpop.f32.mrf.mxu0
    %v98 = vadd.f32 0.0, %v97
    %99 = vmatmul.f32.gmra.mxu0 %v61
    %v100 = vpop.f32.mrf.mxu0
    %v101 = vadd.f32 0.0, %v100
    %102 = vmatmul.f32.gmra.mxu0 %v62
    %v103 = vpop.f32.mrf.mxu0
    %v104 = vadd.f32 0.0, %v103
    %105 = vmatmul.f32.gmra.mxu0 %v63
    %v106 = vpop.f32.mrf.mxu0
    %v107 = vadd.f32 0.0, %v106
    %108 = vdwg.mxu0
    %v109 = vld [vmem:[%s2] sm:$0xff]
    %v110 = vld [vmem:[%s2 + $0x8] sm:$0xff]
    %v111 = vld [vmem:[%s2 + $0x10] sm:$0xff]
    %v112 = vld [vmem:[%s2 + $0x18] sm:$0xff]
    %v113 = vld [vmem:[%s5] sm:$0xff]
    %v114 = vld [vmem:[%s5 + $0x8] sm:$0xff]
    %v115 = vld [vmem:[%s5 + $0x10] sm:$0xff]
    %v116 = vld [vmem:[%s5 + $0x18] sm:$0xff]
    %v117 = vld [vmem:[%s5 + $0x20] sm:$0xff]
    %v118 = vld [vmem:[%s5 + $0x28] sm:$0xff]
    %v119 = vld [vmem:[%s5 + $0x30] sm:$0xff]
    %v120 = vld [vmem:[%s5 + $0x38] sm:$0xff]
    %v121 = vld [vmem:[%s5 + $0x40] sm:$0xff]
    %v122 = vld [vmem:[%s5 + $0x48] sm:$0xff]
    %v123 = vld [vmem:[%s5 + $0x50] sm:$0xff]
    %v124 = vld [vmem:[%s5 + $0x58] sm:$0xff]
    %v125 = vld [vmem:[%s5 + $0x60] sm:$0xff]
    %v126 = vld [vmem:[%s5 + $0x68] sm:$0xff]
    %v127 = vld [vmem:[%s5 + $0x70] sm:$0xff]
    %v128 = vld [vmem:[%s5 + $0x78] sm:$0xff]
    %129 = vmatpush.msra.mxu0 %v128
    %130 = vmatpush.msra.mxu0 %v127
    %131 = vmatpush.msra.mxu0 %v126
    %132 = vmatpush.msra.mxu0 %v125
    %133 = vmatpush.msra.mxu0 %v124
    %134 = vmatpush.msra.mxu0 %v123
    %135 = vmatpush.msra.mxu0 %v122
    %136 = vmatpush.msra.mxu0 %v121
    %137 = vmatpush.msra.mxu0 %v120
    %138 = vmatpush.msra.mxu0 %v119
    %139 = vmatpush.msra.mxu0 %v118
    %140 = vmatpush.msra.mxu0 %v117
    %141 = vmatpush.msra.mxu0 %v116
    %142 = vmatpush.msra.mxu0 %v115
    %143 = vmatpush.msra.mxu0 %v114
    %144 = vmatpush.msra.mxu0 %v113
    %145 = vmatmul.f32.gmra.mxu0 %v109
    %v146 = vpop.f32.mrf.mxu0
    %v147 = vadd.f32 0.0, %v146
    %148 = vmatmul.f32.gmra.mxu0 %v110
    %v149 = vpop.f32.mrf.mxu0
    %v150 = vadd.f32 0.0, %v149
    %151 = vmatmul.f32.gmra.mxu0 %v111
    %v152 = vpop.f32.mrf.mxu0
    %v153 = vadd.f32 0.0, %v152
    %154 = vmatmul.f32.gmra.mxu0 %v112
    %v155 = vpop.f32.mrf.mxu0
    %v156 = vadd.f32 0.0, %v155
    %157 = vdwg.mxu0
    %v158 = vld [vmem:[%s3] sm:$0xff]
    %v159 = vld [vmem:[%s3 + $0x8] sm:$0xff]
    %v160 = vld [vmem:[%s3 + $0x10] sm:$0xff]
    %v161 = vld [vmem:[%s3 + $0x18] sm:$0xff]
    %v162 = vld [vmem:[%s6] sm:$0xff]
    %v163 = vld [vmem:[%s6 + $0x8] sm:$0xff]
    %v164 = vld [vmem:[%s6 + $0x10] sm:$0xff]
    %v165 = vld [vmem:[%s6 + $0x18] sm:$0xff]
    %v166 = vld [vmem:[%s6 + $0x20] sm:$0xff]
    %v167 = vld [vmem:[%s6 + $0x28] sm:$0xff]
    %v168 = vld [vmem:[%s6 + $0x30] sm:$0xff]
    %v169 = vld [vmem:[%s6 + $0x38] sm:$0xff]
    %v170 = vld [vmem:[%s6 + $0x40] sm:$0xff]
    %v171 = vld [vmem:[%s6 + $0x48] sm:$0xff]
    %v172 = vld [vmem:[%s6 + $0x50] sm:$0xff]
    %v173 = vld [vmem:[%s6 + $0x58] sm:$0xff]
    %v174 = vld [vmem:[%s6 + $0x60] sm:$0xff]
    %v175 = vld [vmem:[%s6 + $0x68] sm:$0xff]
    %v176 = vld [vmem:[%s6 + $0x70] sm:$0xff]
    %v177 = vld [vmem:[%s6 + $0x78] sm:$0xff]
    %178 = vmatpush.msra.mxu0 %v177
    %179 = vmatpush.msra.mxu0 %v176
    %180 = vmatpush.msra.mxu0 %v175
    %181 = vmatpush.msra.mxu0 %v174
    %182 = vmatpush.msra.mxu0 %v173
    %183 = vmatpush.msra.mxu0 %v172
    %184 = vmatpush.msra.mxu0 %v171
    %185 = vmatpush.msra.mxu0 %v170
    %186 = vmatpush.msra.mxu0 %v169
    %187 = vmatpush.msra.mxu0 %v168
    %188 = vmatpush.msra.mxu0 %v167
    %189 = vmatpush.msra.mxu0 %v166
    %190 = vmatpush.msra.mxu0 %v165
    %191 = vmatpush.msra.mxu0 %v164
    %192 = vmatpush.msra.mxu0 %v163
    %193 = vmatpush.msra.mxu0 %v162
    %194 = vmatmul.f32.gmra.mxu0 %v158
    %v195 = vpop.f32.mrf.mxu0
    %v196 = vadd.f32 0.0, %v195
    %197 = vmatmul.f32.gmra.mxu0 %v159
    %v198 = vpop.f32.mrf.mxu0
    %v199 = vadd.f32 0.0, %v198
    %200 = vmatmul.f32.gmra.mxu0 %v160
    %v201 = vpop.f32.mrf.mxu0
    %v202 = vadd.f32 0.0, %v201
    %203 = vmatmul.f32.gmra.mxu0 %v161
    %v204 = vpop.f32.mrf.mxu0
    %v205 = vadd.f32 0.0, %v204
    %206 = vdwg.mxu0
    %s207 = smul.u32 0, 2
    %v208 = vlaneseq
    %v209 = vand.u32 %v208, 127
    %s210 = sld [smem:[#allocation3 + %s207]]
    %v211 = vstv %s210
    %vm212 = vcmp.ge.s32.totalorder %v209, %v211
    %v213 = vsel %vm212, 1e+09, 0.0
    %s214 = sadd.s32 %s207, 1
    %s215 = sld [smem:[#allocation3 + %s214]]
    %v216 = vstv %s215
    %vm217 = vcmp.ge.s32.totalorder %v209, %v216
    %v218 = vsel %vm217, 1e+09, 0.0
    %vm219 = vcmask 261120
    %v221 = vsel %vm219, %v98, 0
    %v224 = vsel %vm219, %v101, 0
    %v227 = vsel %vm219, %v147, 0
    %v230 = vsel %vm219, %v150, 0
    %232 = vmatpush.xpose.msra.mxu0 0.0
    %233 = vmatpush.xpose.msra.mxu0 0.0
    %234 = vmatpush.xpose.msra.mxu0 0.0
    %235 = vmatpush.xpose.msra.mxu0 0.0
    %236 = vmatpush.xpose.msra.mxu0 0.0
    %237 = vmatpush.xpose.msra.mxu0 0.0
    %238 = vmatpush.xpose.msra.mxu0 0.0
    %239 = vmatpush.xpose.msra.mxu0 0.0
    %240 = vmatpush.xpose.msra.mxu0 0.0
    %241 = vmatpush.xpose.msra.mxu0 0.0
    %242 = vmatpush.xpose.msra.mxu0 0.0
    %243 = vmatpush.xpose.msra.mxu0 0.0
    %244 = vmatpush.xpose.msra.mxu0 0.0
    %245 = vmatpush.xpose.msra.mxu0 0.0
    %246 = vmatpush.xpose.msra.mxu0 %v230
    %247 = vmatpush.xpose.msra.mxu0 %v227
    %248 = vmatmul.f32.gmra.mxu0 %v221
    %v249 = vpop.f32.mrf.mxu0
    %v250 = vadd.f32 0.0, %v249
    %251 = vmatmul.f32.gmra.mxu0 %v224
    %v252 = vpop.f32.mrf.mxu0
    %v253 = vadd.f32 0.0, %v252
    %254 = vdwg.mxu0
    %v256 = vsel %vm219, %v104, 0
    %v259 = vsel %vm219, %v107, 0
    %v262 = vsel %vm219, %v153, 0
    %v265 = vsel %vm219, %v156, 0
    %267 = vmatpush.xpose.msra.mxu0 0.0
    %268 = vmatpush.xpose.msra.mxu0 0.0
    %269 = vmatpush.xpose.msra.mxu0 0.0
    %270 = vmatpush.xpose.msra.mxu0 0.0
    %271 = vmatpush.xpose.msra.mxu0 0.0
    %272 = vmatpush.xpose.msra.mxu0 0.0
    %273 = vmatpush.xpose.msra.mxu0 0.0
    %274 = vmatpush.xpose.msra.mxu0 0.0
    %275 = vmatpush.xpose.msra.mxu0 0.0
    %276 = vmatpush.xpose.msra.mxu0 0.0
    %277 = vmatpush.xpose.msra.mxu0 0.0
    %278 = vmatpush.xpose.msra.mxu0 0.0
    %279 = vmatpush.xpose.msra.mxu0 0.0
    %280 = vmatpush.xpose.msra.mxu0 0.0
    %281 = vmatpush.xpose.msra.mxu0 %v265
    %282 = vmatpush.xpose.msra.mxu0 %v262
    %283 = vmatmul.f32.gmra.mxu0 %v256
    %v284 = vpop.f32.mrf.mxu0
    %v285 = vadd.f32 0.0, %v284
    %286 = vmatmul.f32.gmra.mxu0 %v259
    %v287 = vpop.f32.mrf.mxu0
    %v288 = vadd.f32 0.0, %v287
    %289 = vdwg.mxu0
    %v290 = vmul.f32 %v250, 0.17677669
    %v291 = vmul.f32 %v253, 0.17677669
    %v292 = vmul.f32 %v285, 0.17677669
    %v293 = vmul.f32 %v288, 0.17677669
    %v294 = vperm.slane %v213, 0
    %v295 = vperm.slane %v218, 0
    %v296 = vsub.f32 %v290, %v294
    %v297 = vsub.f32 %v291, %v294
    %v298 = vsub.f32 %v292, %v295
    %v299 = vsub.f32 %v293, %v295
    %vm300 = vcmask 130048
    %v301 = vsel %vm300, %v296, -inf
    %302 = vmax.xlane.f32.xlu0 %v301
    %v303 = vpop.xlane.xlu0 %302
    %v304 = vsel %vm300, %v297, -inf
    %305 = vmax.xlane.f32.xlu0 %v304
    %v306 = vpop.xlane.xlu0 %305
    %v307 = vsel %vm300, %v298, -inf
    %308 = vmax.xlane.f32.xlu0 %v307
    %v309 = vpop.xlane.xlu0 %308
    %v310 = vsel %vm300, %v299, -inf
    %311 = vmax.xlane.f32.xlu0 %v310
    %v312 = vpop.xlane.xlu0 %311
    %v313 = vsub.f32 %v296, %v303
    %v314 = vsub.f32 %v297, %v306
    %v315 = vsub.f32 %v298, %v309
    %v316 = vsub.f32 %v299, %v312
    %v317 = vmul.f32 %v313, 1.442695
    %v318 = vpow.pop %v317
    %v319 = vmul.f32 %v314, 1.442695
    %v320 = vpow.pop %v319
    %v321 = vmul.f32 %v315, 1.442695
    %v322 = vpow.pop %v321
    %v323 = vmul.f32 %v316, 1.442695
    %v324 = vpow.pop %v323
    %v325 = vsel %vm300, %v318, 0.0
    %326 = vadd.xlane.f32.xlu0 %v325
    %v327 = vpop.xlane.xlu0 %326
    %v328 = vsel %vm300, %v320, 0.0
    %329 = vadd.xlane.f32.xlu0 %v328
    %v330 = vpop.xlane.xlu0 %329
    %v331 = vsel %vm300, %v322, 0.0
    %332 = vadd.xlane.f32.xlu0 %v331
    %v333 = vpop.xlane.xlu0 %332
    %v334 = vsel %vm300, %v324, 0.0
    %335 = vadd.xlane.f32.xlu0 %v334
    %v336 = vpop.xlane.xlu0 %335
    %v337 = vrcp.pop %v327
    %v338 = vrcp.pop %v330
    %v339 = vrcp.pop %v333
    %v340 = vrcp.pop %v336
    %v341 = vmul.f32 %v318, %v337
    %v342 = vmul.f32 %v320, %v338
    %v343 = vmul.f32 %v322, %v339
    %v344 = vmul.f32 %v324, %v340
    %v346 = vsel %vm300, %v341, 0
    %v349 = vsel %vm300, %v342, 0
    %351 = vmatpush.msra.mxu0 0.0
    %352 = vmatpush.msra.mxu0 0.0
    %353 = vmatpush.msra.mxu0 0.0
    %354 = vmatpush.msra.mxu0 0.0
    %355 = vmatpush.msra.mxu0 0.0
    %356 = vmatpush.msra.mxu0 0.0
    %357 = vmatpush.msra.mxu0 0.0
    %358 = vmatpush.msra.mxu0 0.0
    %359 = vmatpush.msra.mxu0 0.0
    %360 = vmatpush.msra.mxu0 0.0
    %361 = vmatpush.msra.mxu0 0.0
    %362 = vmatpush.msra.mxu0 0.0
    %363 = vmatpush.msra.mxu0 0.0
    %364 = vmatpush.msra.mxu0 0.0
    %365 = vmatpush.msra.mxu0 %v199
    %366 = vmatpush.msra.mxu0 %v196
    %367 = vmatmul.f32.gmra.mxu0 %v346
    %v368 = vpop.f32.mrf.mxu0
    %v369 = vadd.f32 0.0, %v368
    %370 = vmatmul.f32.gmra.mxu0 %v349
    %v371 = vpop.f32.mrf.mxu0
    %v372 = vadd.f32 0.0, %v371
    %373 = vdwg.mxu0
    %v375 = vsel %vm300, %v343, 0
    %v378 = vsel %vm300, %v344, 0
    %380 = vmatpush.msra.mxu0 0.0
    %381 = vmatpush.msra.mxu0 0.0
    %382 = vmatpush.msra.mxu0 0.0
    %383 = vmatpush.msra.mxu0 0.0
    %384 = vmatpush.msra.mxu0 0.0
    %385 = vmatpush.msra.mxu0 0.0
    %386 = vmatpush.msra.mxu0 0.0
    %387 = vmatpush.msra.mxu0 0.0
    %388 = vmatpush.msra.mxu0 0.0
    %389 = vmatpush.msra.mxu0 0.0
    %390 = vmatpush.msra.mxu0 0.0
    %391 = vmatpush.msra.mxu0 0.0
    %392 = vmatpush.msra.mxu0 0.0
    %393 = vmatpush.msra.mxu0 0.0
    %394 = vmatpush.msra.mxu0 %v205
    %395 = vmatpush.msra.mxu0 %v202
    %396 = vmatmul.f32.gmra.mxu0 %v375
    %v397 = vpop.f32.mrf.mxu0
    %v398 = vadd.f32 0.0, %v397
    %399 = vmatmul.f32.gmra.mxu0 %v378
    %v400 = vpop.f32.mrf.mxu0
    %v401 = vadd.f32 0.0, %v400
    %402 = vdwg.mxu0
    %v403 = vld [vmem:[%s7] sm:$0xff]
    %v404 = vld [vmem:[%s7 + $0x8] sm:$0xff]
    %v405 = vld [vmem:[%s7 + $0x10] sm:$0xff]
    %v406 = vld [vmem:[%s7 + $0x18] sm:$0xff]
    %407 = vrot.lane.b32.xlu0 %v98, 96
    %v408 = vpop.permute.xlu0 %407
    %409 = vrot.lane.b32.xlu0 %v101, 96
    %v410 = vpop.permute.xlu0 %409
    %411 = vrot.lane.b32.xlu0 %v147, 96
    %v412 = vpop.permute.xlu0 %411
    %413 = vrot.lane.b32.xlu0 %v150, 96
    %v414 = vpop.permute.xlu0 %413
    %v415 = vsel %vm219, %v408, 0
    %v417 = vsel %vm219, %v410, 0
    %v419 = vsel %vm219, %v412, 0
    %v421 = vsel %vm219, %v414, 0
    %423 = vmatpush.xpose.msra.mxu0 0.0
    %424 = vmatpush.xpose.msra.mxu0 0.0
    %425 = vmatpush.xpose.msra.mxu0 0.0
    %426 = vmatpush.xpose.msra.mxu0 0.0
    %427 = vmatpush.xpose.msra.mxu0 0.0
    %428 = vmatpush.xpose.msra.mxu0 0.0
    %429 = vmatpush.xpose.msra.mxu0 0.0
    %430 = vmatpush.xpose.msra.mxu0 0.0
    %431 = vmatpush.xpose.msra.mxu0 0.0
    %432 = vmatpush.xpose.msra.mxu0 0.0
    %433 = vmatpush.xpose.msra.mxu0 0.0
    %434 = vmatpush.xpose.msra.mxu0 0.0
    %435 = vmatpush.xpose.msra.mxu0 0.0
    %436 = vmatpush.xpose.msra.mxu0 0.0
    %437 = vmatpush.xpose.msra.mxu0 %v421
    %438 = vmatpush.xpose.msra.mxu0 %v419
    %439 = vmatmul.f32.gmra.mxu0 %v415
    %v440 = vpop.f32.mrf.mxu0
    %v441 = vadd.f32 0.0, %v440
    %442 = vmatmul.f32.gmra.mxu0 %v417
    %v443 = vpop.f32.mrf.mxu0
    %v444 = vadd.f32 0.0, %v443
    %445 = vdwg.mxu0
    %446 = vrot.lane.b32.xlu0 %v104, 96
    %v447 = vpop.permute.xlu0 %446
    %448 = vrot.lane.b32.xlu0 %v107, 96
    %v449 = vpop.permute.xlu0 %448
    %450 = vrot.lane.b32.xlu0 %v153, 96
    %v451 = vpop.permute.xlu0 %450
    %452 = vrot.lane.b32.xlu0 %v156, 96
    %v453 = vpop.permute.xlu0 %452
    %v454 = vsel %vm219, %v447, 0
    %v456 = vsel %vm219, %v449, 0
    %v458 = vsel %vm219, %v451, 0
    %v460 = vsel %vm219, %v453, 0
    %462 = vmatpush.xpose.msra.mxu0 0.0
    %463 = vmatpush.xpose.msra.mxu0 0.0
    %464 = vmatpush.xpose.msra.mxu0 0.0
    %465 = vmatpush.xpose.msra.mxu0 0.0
    %466 = vmatpush.xpose.msra.mxu0 0.0
    %467 = vmatpush.xpose.msra.mxu0 0.0
    %468 = vmatpush.xpose.msra.mxu0 0.0
    %469 = vmatpush.xpose.msra.mxu0 0.0
    %470 = vmatpush.xpose.msra.mxu0 0.0
    %471 = vmatpush.xpose.msra.mxu0 0.0
    %472 = vmatpush.xpose.msra.mxu0 0.0
    %473 = vmatpush.xpose.msra.mxu0 0.0
    %474 = vmatpush.xpose.msra.mxu0 0.0
    %475 = vmatpush.xpose.msra.mxu0 0.0
    %476 = vmatpush.xpose.msra.mxu0 %v460
    %477 = vmatpush.xpose.msra.mxu0 %v458
    %478 = vmatmul.f32.gmra.mxu0 %v454
    %v479 = vpop.f32.mrf.mxu0
    %v480 = vadd.f32 0.0, %v479
    %481 = vmatmul.f32.gmra.mxu0 %v456
    %v482 = vpop.f32.mrf.mxu0
    %v483 = vadd.f32 0.0, %v482
    %484 = vdwg.mxu0
    %v485 = vmul.f32 %v441, 0.17677669
    %v486 = vmul.f32 %v444, 0.17677669
    %v487 = vmul.f32 %v480, 0.17677669
    %v488 = vmul.f32 %v483, 0.17677669
    %v489 = vsub.f32 %v485, %v294
    %v490 = vsub.f32 %v486, %v294
    %v491 = vsub.f32 %v487, %v295
    %v492 = vsub.f32 %v488, %v295
    %v493 = vsel %vm300, %v489, -inf
    %494 = vmax.xlane.f32.xlu0 %v493
    %v495 = vpop.xlane.xlu0 %494
    %v496 = vsel %vm300, %v490, -inf
    %497 = vmax.xlane.f32.xlu0 %v496
    %v498 = vpop.xlane.xlu0 %497
    %v499 = vsel %vm300, %v491, -inf
    %500 = vmax.xlane.f32.xlu0 %v499
    %v501 = vpop.xlane.xlu0 %500
    %v502 = vsel %vm300, %v492, -inf
    %503 = vmax.xlane.f32.xlu0 %v502
    %v504 = vpop.xlane.xlu0 %503
    %v505 = vsub.f32 %v489, %v495
    %v506 = vsub.f32 %v490, %v498
    %v507 = vsub.f32 %v491, %v501
    %v508 = vsub.f32 %v492, %v504
    %v509 = vmul.f32 %v505, 1.442695
    %v510 = vpow.pop %v509
    %v511 = vmul.f32 %v506, 1.442695
    %v512 = vpow.pop %v511
    %v513 = vmul.f32 %v507, 1.442695
    %v514 = vpow.pop %v513
    %v515 = vmul.f32 %v508, 1.442695
    %v516 = vpow.pop %v515
    %v517 = vsel %vm300, %v510, 0.0
    %518 = vadd.xlane.f32.xlu0 %v517
    %v519 = vpop.xlane.xlu0 %518
    %v520 = vsel %vm300, %v512, 0.0
    %521 = vadd.xlane.f32.xlu0 %v520
    %v522 = vpop.xlane.xlu0 %521
    %v523 = vsel %vm300, %v514, 0.0
    %524 = vadd.xlane.f32.xlu0 %v523
    %v525 = vpop.xlane.xlu0 %524
    %v526 = vsel %vm300, %v516, 0.0
    %527 = vadd.xlane.f32.xlu0 %v526
    %v528 = vpop.xlane.xlu0 %527
    %v529 = vrcp.pop %v519
    %v530 = vrcp.pop %v522
    %v531 = vrcp.pop %v525
    %v532 = vrcp.pop %v528
    %v533 = vmul.f32 %v510, %v529
    %v534 = vmul.f32 %v512, %v530
    %v535 = vmul.f32 %v514, %v531
    %v536 = vmul.f32 %v516, %v532
    %539 = vrot.lane.b32.xlu0 %v196, 96
    %v540 = vpop.permute.xlu0 %539
    %541 = vrot.lane.b32.xlu0 %v199, 96
    %v542 = vpop.permute.xlu0 %541
    %v546 = vsel %vm300, %v533, 0
    %v549 = vsel %vm300, %v534, 0
    %551 = vmatpush.msra.mxu0 0.0
    %552 = vmatpush.msra.mxu0 0.0
    %553 = vmatpush.msra.mxu0 0.0
    %554 = vmatpush.msra.mxu0 0.0
    %555 = vmatpush.msra.mxu0 0.0
    %556 = vmatpush.msra.mxu0 0.0
    %557 = vmatpush.msra.mxu0 0.0
    %558 = vmatpush.msra.mxu0 0.0
    %559 = vmatpush.msra.mxu0 0.0
    %560 = vmatpush.msra.mxu0 0.0
    %561 = vmatpush.msra.mxu0 0.0
    %562 = vmatpush.msra.mxu0 0.0
    %563 = vmatpush.msra.mxu0 0.0
    %564 = vmatpush.msra.mxu0 0.0
    %565 = vmatpush.msra.mxu0 %v542
    %566 = vmatpush.msra.mxu0 %v540
    %567 = vmatmul.f32.gmra.mxu0 %v546
    %v568 = vpop.f32.mrf.mxu0
    %v569 = vadd.f32 0.0, %v568
    %570 = vmatmul.f32.gmra.mxu0 %v549
    %v571 = vpop.f32.mrf.mxu0
    %v572 = vadd.f32 0.0, %v571
    %573 = vdwg.mxu0
    %576 = vrot.lane.b32.xlu0 %v202, 96
    %v577 = vpop.permute.xlu0 %576
    %578 = vrot.lane.b32.xlu0 %v205, 96
    %v579 = vpop.permute.xlu0 %578
    %v583 = vsel %vm300, %v535, 0
    %v586 = vsel %vm300, %v536, 0
    %588 = vmatpush.msra.mxu0 0.0
    %589 = vmatpush.msra.mxu0 0.0
    %590 = vmatpush.msra.mxu0 0.0
    %591 = vmatpush.msra.mxu0 0.0
    %592 = vmatpush.msra.mxu0 0.0
    %593 = vmatpush.msra.mxu0 0.0
    %594 = vmatpush.msra.mxu0 0.0
    %595 = vmatpush.msra.mxu0 0.0
    %596 = vmatpush.msra.mxu0 0.0
    %597 = vmatpush.msra.mxu0 0.0
    %598 = vmatpush.msra.mxu0 0.0
    %599 = vmatpush.msra.mxu0 0.0
    %600 = vmatpush.msra.mxu0 0.0
    %601 = vmatpush.msra.mxu0 0.0
    %602 = vmatpush.msra.mxu0 %v579
    %603 = vmatpush.msra.mxu0 %v577
    %604 = vmatmul.f32.gmra.mxu0 %v583
    %v605 = vpop.f32.mrf.mxu0
    %v606 = vadd.f32 0.0, %v605
    %607 = vmatmul.f32.gmra.mxu0 %v586
    %v608 = vpop.f32.mrf.mxu0
    %v609 = vadd.f32 0.0, %v608
    %610 = vdwg.mxu0
    %v611 = vld [vmem:[%s7 + $0x20] sm:$0xff]
    %v612 = vld [vmem:[%s7 + $0x28] sm:$0xff]
    %v613 = vld [vmem:[%s7 + $0x30] sm:$0xff]
    %v614 = vld [vmem:[%s7 + $0x38] sm:$0xff]
    %v616 = vsel %vm219, %v569, 0
    %v619 = vsel %vm219, %v572, 0
    %v622 = vsel %vm219, %v606, 0
    %v625 = vsel %vm219, %v609, 0
    %627 = vmatpush.msra.mxu0 0.0
    %628 = vmatpush.msra.mxu0 0.0
    %629 = vmatpush.msra.mxu0 0.0
    %630 = vmatpush.msra.mxu0 0.0
    %631 = vmatpush.msra.mxu0 0.0
    %632 = vmatpush.msra.mxu0 0.0
    %633 = vmatpush.msra.mxu0 0.0
    %634 = vmatpush.msra.mxu0 0.0
    %635 = vmatpush.msra.mxu0 0.0
    %636 = vmatpush.msra.mxu0 0.0
    %637 = vmatpush.msra.mxu0 0.0
    %638 = vmatpush.msra.mxu0 0.0
    %639 = vmatpush.msra.mxu0 %v614
    %640 = vmatpush.msra.mxu0 %v613
    %641 = vmatpush.msra.mxu0 %v612
    %642 = vmatpush.msra.mxu0 %v611
    %643 = vmatmul.f32.gmra.mxu0 %v616
    %v644 = vpop.f32.mrf.mxu0
    %v645 = vadd.f32 0.0, %v644
    %646 = vmatmul.f32.gmra.mxu0 %v619
    %v647 = vpop.f32.mrf.mxu0
    %v648 = vadd.f32 0.0, %v647
    %649 = vmatmul.f32.gmra.mxu0 %v622
    %v650 = vpop.f32.mrf.mxu0
    %v651 = vadd.f32 0.0, %v650
    %652 = vmatmul.f32.gmra.mxu0 %v625
    %v653 = vpop.f32.mrf.mxu0
    %v654 = vadd.f32 0.0, %v653
    %655 = vdwg.mxu0
    %v657 = vsel %vm219, %v369, 0
    %v660 = vsel %vm219, %v372, 0
    %v663 = vsel %vm219, %v398, 0
    %v666 = vsel %vm219, %v401, 0
    %668 = vmatpush.msra.mxu0 0.0
    %669 = vmatpush.msra.mxu0 0.0
    %670 = vmatpush.msra.mxu0 0.0
    %671 = vmatpush.msra.mxu0 0.0
    %672 = vmatpush.msra.mxu0 0.0
    %673 = vmatpush.msra.mxu0 0.0
    %674 = vmatpush.msra.mxu0 0.0
    %675 = vmatpush.msra.mxu0 0.0
    %676 = vmatpush.msra.mxu0 0.0
    %677 = vmatpush.msra.mxu0 0.0
    %678 = vmatpush.msra.mxu0 0.0
    %679 = vmatpush.msra.mxu0 0.0
    %680 = vmatpush.msra.mxu0 %v406
    %681 = vmatpush.msra.mxu0 %v405
    %682 = vmatpush.msra.mxu0 %v404
    %683 = vmatpush.msra.mxu0 %v403
    %684 = vmatmul.f32.gmra.mxu0 %v657
    %v685 = vpop.f32.mrf.mxu0
    %v686 = vadd.f32 %v645, %v685
    %687 = vmatmul.f32.gmra.mxu0 %v660
    %v688 = vpop.f32.mrf.mxu0
    %v689 = vadd.f32 %v648, %v688
    %690 = vmatmul.f32.gmra.mxu0 %v663
    %v691 = vpop.f32.mrf.mxu0
    %v692 = vadd.f32 %v651, %v691
    %693 = vmatmul.f32.gmra.mxu0 %v666
    %v694 = vpop.f32.mrf.mxu0
    %v695 = vadd.f32 %v654, %v694
    %696 = vdwg.mxu0
    %697 = vrot.lane.b32.xlu0 %v98, 64
    %v698 = vpop.permute.xlu0 %697
    %699 = vrot.lane.b32.xlu0 %v101, 64
    %v700 = vpop.permute.xlu0 %699
    %701 = vrot.lane.b32.xlu0 %v147, 64
    %v702 = vpop.permute.xlu0 %701
    %703 = vrot.lane.b32.xlu0 %v150, 64
    %v704 = vpop.permute.xlu0 %703
    %v705 = vsel %vm219, %v698, 0
    %v707 = vsel %vm219, %v700, 0
    %v709 = vsel %vm219, %v702, 0
    %v711 = vsel %vm219, %v704, 0
    %713 = vmatpush.xpose.msra.mxu0 0.0
    %714 = vmatpush.xpose.msra.mxu0 0.0
    %715 = vmatpush.xpose.msra.mxu0 0.0
    %716 = vmatpush.xpose.msra.mxu0 0.0
    %717 = vmatpush.xpose.msra.mxu0 0.0
    %718 = vmatpush.xpose.msra.mxu0 0.0
    %719 = vmatpush.xpose.msra.mxu0 0.0
    %720 = vmatpush.xpose.msra.mxu0 0.0
    %721 = vmatpush.xpose.msra.mxu0 0.0
    %722 = vmatpush.xpose.msra.mxu0 0.0
    %723 = vmatpush.xpose.msra.mxu0 0.0
    %724 = vmatpush.xpose.msra.mxu0 0.0
    %725 = vmatpush.xpose.msra.mxu0 0.0
    %726 = vmatpush.xpose.msra.mxu0 0.0
    %727 = vmatpush.xpose.msra.mxu0 %v711
    %728 = vmatpush.xpose.msra.mxu0 %v709
    %729 = vmatmul.f32.gmra.mxu0 %v705
    %v730 = vpop.f32.mrf.mxu0
    %v731 = vadd.f32 0.0, %v730
    %732 = vmatmul.f32.gmra.mxu0 %v707
    %v733 = vpop.f32.mrf.mxu0
    %v734 = vadd.f32 0.0, %v733
    %735 = vdwg.mxu0
    %736 = vrot.lane.b32.xlu0 %v104, 64
    %v737 = vpop.permute.xlu0 %736
    %738 = vrot.lane.b32.xlu0 %v107, 64
    %v739 = vpop.permute.xlu0 %738
    %740 = vrot.lane.b32.xlu0 %v153, 64
    %v741 = vpop.permute.xlu0 %740
    %742 = vrot.lane.b32.xlu0 %v156, 64
    %v743 = vpop.permute.xlu0 %742
    %v744 = vsel %vm219, %v737, 0
    %v746 = vsel %vm219, %v739, 0
    %v748 = vsel %vm219, %v741, 0
    %v750 = vsel %vm219, %v743, 0
    %752 = vmatpush.xpose.msra.mxu0 0.0
    %753 = vmatpush.xpose.msra.mxu0 0.0
    %754 = vmatpush.xpose.msra.mxu0 0.0
    %755 = vmatpush.xpose.msra.mxu0 0.0
    %756 = vmatpush.xpose.msra.mxu0 0.0
    %757 = vmatpush.xpose.msra.mxu0 0.0
    %758 = vmatpush.xpose.msra.mxu0 0.0
    %759 = vmatpush.xpose.msra.mxu0 0.0
    %760 = vmatpush.xpose.msra.mxu0 0.0
    %761 = vmatpush.xpose.msra.mxu0 0.0
    %762 = vmatpush.xpose.msra.mxu0 0.0
    %763 = vmatpush.xpose.msra.mxu0 0.0
    %764 = vmatpush.xpose.msra.mxu0 0.0
    %765 = vmatpush.xpose.msra.mxu0 0.0
    %766 = vmatpush.xpose.msra.mxu0 %v750
    %767 = vmatpush.xpose.msra.mxu0 %v748
    %768 = vmatmul.f32.gmra.mxu0 %v744
    %v769 = vpop.f32.mrf.mxu0
    %v770 = vadd.f32 0.0, %v769
    %771 = vmatmul.f32.gmra.mxu0 %v746
    %v772 = vpop.f32.mrf.mxu0
    %v773 = vadd.f32 0.0, %v772
    %774 = vdwg.mxu0
    %v775 = vmul.f32 %v731, 0.17677669
    %v776 = vmul.f32 %v734, 0.17677669
    %v777 = vmul.f32 %v770, 0.17677669
    %v778 = vmul.f32 %v773, 0.17677669
    %v779 = vsub.f32 %v775, %v294
    %v780 = vsub.f32 %v776, %v294
    %v781 = vsub.f32 %v777, %v295
    %v782 = vsub.f32 %v778, %v295
    %v783 = vsel %vm300, %v779, -inf
    %784 = vmax.xlane.f32.xlu0 %v783
    %v785 = vpop.xlane.xlu0 %784
    %v786 = vsel %vm300, %v780, -inf
    %787 = vmax.xlane.f32.xlu0 %v786
    %v788 = vpop.xlane.xlu0 %787
    %v789 = vsel %vm300, %v781, -inf
    %790 = vmax.xlane.f32.xlu0 %v789
    %v791 = vpop.xlane.xlu0 %790
    %v792 = vsel %vm300, %v782, -inf
    %793 = vmax.xlane.f32.xlu0 %v792
    %v794 = vpop.xlane.xlu0 %793
    %v795 = vsub.f32 %v779, %v785
    %v796 = vsub.f32 %v780, %v788
    %v797 = vsub.f32 %v781, %v791
    %v798 = vsub.f32 %v782, %v794
    %v799 = vmul.f32 %v795, 1.442695
    %v800 = vpow.pop %v799
    %v801 = vmul.f32 %v796, 1.442695
    %v802 = vpow.pop %v801
    %v803 = vmul.f32 %v797, 1.442695
    %v804 = vpow.pop %v803
    %v805 = vmul.f32 %v798, 1.442695
    %v806 = vpow.pop %v805
    %v807 = vsel %vm300, %v800, 0.0
    %808 = vadd.xlane.f32.xlu0 %v807
    %v809 = vpop.xlane.xlu0 %808
    %v810 = vsel %vm300, %v802, 0.0
    %811 = vadd.xlane.f32.xlu0 %v810
    %v812 = vpop.xlane.xlu0 %811
    %v813 = vsel %vm300, %v804, 0.0
    %814 = vadd.xlane.f32.xlu0 %v813
    %v815 = vpop.xlane.xlu0 %814
    %v816 = vsel %vm300, %v806, 0.0
    %817 = vadd.xlane.f32.xlu0 %v816
    %v818 = vpop.xlane.xlu0 %817
    %v819 = vrcp.pop %v809
    %v820 = vrcp.pop %v812
    %v821 = vrcp.pop %v815
    %v822 = vrcp.pop %v818
    %v823 = vmul.f32 %v800, %v819
    %v824 = vmul.f32 %v802, %v820
    %v825 = vmul.f32 %v804, %v821
    %v826 = vmul.f32 %v806, %v822
    %827 = vrot.lane.b32.xlu0 %v196, 64
    %v828 = vpop.permute.xlu0 %827
    %829 = vrot.lane.b32.xlu0 %v199, 64
    %v830 = vpop.permute.xlu0 %829
    %v834 = vsel %vm300, %v823, 0
    %v837 = vsel %vm300, %v824, 0
    %839 = vmatpush.msra.mxu0 0.0
    %840 = vmatpush.msra.mxu0 0.0
    %841 = vmatpush.msra.mxu0 0.0
    %842 = vmatpush.msra.mxu0 0.0
    %843 = vmatpush.msra.mxu0 0.0
    %844 = vmatpush.msra.mxu0 0.0
    %845 = vmatpush.msra.mxu0 0.0
    %846 = vmatpush.msra.mxu0 0.0
    %847 = vmatpush.msra.mxu0 0.0
    %848 = vmatpush.msra.mxu0 0.0
    %849 = vmatpush.msra.mxu0 0.0
    %850 = vmatpush.msra.mxu0 0.0
    %851 = vmatpush.msra.mxu0 0.0
    %852 = vmatpush.msra.mxu0 0.0
    %853 = vmatpush.msra.mxu0 %v830
    %854 = vmatpush.msra.mxu0 %v828
    %855 = vmatmul.f32.gmra.mxu0 %v834
    %v856 = vpop.f32.mrf.mxu0
    %v857 = vadd.f32 0.0, %v856
    %858 = vmatmul.f32.gmra.mxu0 %v837
    %v859 = vpop.f32.mrf.mxu0
    %v860 = vadd.f32 0.0, %v859
    %861 = vdwg.mxu0
    %862 = vrot.lane.b32.xlu0 %v202, 64
    %v863 = vpop.permute.xlu0 %862
    %864 = vrot.lane.b32.xlu0 %v205, 64
    %v865 = vpop.permute.xlu0 %864
    %v869 = vsel %vm300, %v825, 0
    %v872 = vsel %vm300, %v826, 0
    %874 = vmatpush.msra.mxu0 0.0
    %875 = vmatpush.msra.mxu0 0.0
    %876 = vmatpush.msra.mxu0 0.0
    %877 = vmatpush.msra.mxu0 0.0
    %878 = vmatpush.msra.mxu0 0.0
    %879 = vmatpush.msra.mxu0 0.0
    %880 = vmatpush.msra.mxu0 0.0
    %881 = vmatpush.msra.mxu0 0.0
    %882 = vmatpush.msra.mxu0 0.0
    %883 = vmatpush.msra.mxu0 0.0
    %884 = vmatpush.msra.mxu0 0.0
    %885 = vmatpush.msra.mxu0 0.0
    %886 = vmatpush.msra.mxu0 0.0
    %887 = vmatpush.msra.mxu0 0.0
    %888 = vmatpush.msra.mxu0 %v865
    %889 = vmatpush.msra.mxu0 %v863
    %890 = vmatmul.f32.gmra.mxu0 %v869
    %v891 = vpop.f32.mrf.mxu0
    %v892 = vadd.f32 0.0, %v891
    %893 = vmatmul.f32.gmra.mxu0 %v872
    %v894 = vpop.f32.mrf.mxu0
    %v895 = vadd.f32 0.0, %v894
    %896 = vdwg.mxu0
    %v897 = vld [vmem:[%s7 + $0x40] sm:$0xff]
    %v898 = vld [vmem:[%s7 + $0x48] sm:$0xff]
    %v899 = vld [vmem:[%s7 + $0x50] sm:$0xff]
    %v900 = vld [vmem:[%s7 + $0x58] sm:$0xff]
    %v902 = vsel %vm219, %v857, 0
    %v905 = vsel %vm219, %v860, 0
    %v908 = vsel %vm219, %v892, 0
    %v911 = vsel %vm219, %v895, 0
    %913 = vmatpush.msra.mxu0 0.0
    %914 = vmatpush.msra.mxu0 0.0
    %915 = vmatpush.msra.mxu0 0.0
    %916 = vmatpush.msra.mxu0 0.0
    %917 = vmatpush.msra.mxu0 0.0
    %918 = vmatpush.msra.mxu0 0.0
    %919 = vmatpush.msra.mxu0 0.0
    %920 = vmatpush.msra.mxu0 0.0
    %921 = vmatpush.msra.mxu0 0.0
    %922 = vmatpush.msra.mxu0 0.0
    %923 = vmatpush.msra.mxu0 0.0
    %924 = vmatpush.msra.mxu0 0.0
    %925 = vmatpush.msra.mxu0 %v900
    %926 = vmatpush.msra.mxu0 %v899
    %927 = vmatpush.msra.mxu0 %v898
    %928 = vmatpush.msra.mxu0 %v897
    %929 = vmatmul.f32.gmra.mxu0 %v902
    %v930 = vpop.f32.mrf.mxu0
    %v931 = vadd.f32 0.0, %v930
    %932 = vmatmul.f32.gmra.mxu0 %v905
    %v933 = vpop.f32.mrf.mxu0
    %v934 = vadd.f32 0.0, %v933
    %935 = vmatmul.f32.gmra.mxu0 %v908
    %v936 = vpop.f32.mrf.mxu0
    %v937 = vadd.f32 0.0, %v936
    %938 = vmatmul.f32.gmra.mxu0 %v911
    %v939 = vpop.f32.mrf.mxu0
    %v940 = vadd.f32 0.0, %v939
    %941 = vdwg.mxu0
    %v942 = vadd.f32 %v686, %v931
    %v943 = vadd.f32 %v689, %v934
    %v944 = vadd.f32 %v692, %v937
    %v945 = vadd.f32 %v695, %v940
    %946 = vrot.lane.b32.xlu0 %v98, 32
    %v947 = vpop.permute.xlu0 %946
    %948 = vrot.lane.b32.xlu0 %v101, 32
    %v949 = vpop.permute.xlu0 %948
    %950 = vrot.lane.b32.xlu0 %v147, 32
    %v951 = vpop.permute.xlu0 %950
    %952 = vrot.lane.b32.xlu0 %v150, 32
    %v953 = vpop.permute.xlu0 %952
    %v954 = vsel %vm219, %v947, 0
    %v956 = vsel %vm219, %v949, 0
    %v958 = vsel %vm219, %v951, 0
    %v960 = vsel %vm219, %v953, 0
    %962 = vmatpush.xpose.msra.mxu0 0.0
    %963 = vmatpush.xpose.msra.mxu0 0.0
    %964 = vmatpush.xpose.msra.mxu0 0.0
    %965 = vmatpush.xpose.msra.mxu0 0.0
    %966 = vmatpush.xpose.msra.mxu0 0.0
    %967 = vmatpush.xpose.msra.mxu0 0.0
    %968 = vmatpush.xpose.msra.mxu0 0.0
    %969 = vmatpush.xpose.msra.mxu0 0.0
    %970 = vmatpush.xpose.msra.mxu0 0.0
    %971 = vmatpush.xpose.msra.mxu0 0.0
    %972 = vmatpush.xpose.msra.mxu0 0.0
    %973 = vmatpush.xpose.msra.mxu0 0.0
    %974 = vmatpush.xpose.msra.mxu0 0.0
    %975 = vmatpush.xpose.msra.mxu0 0.0
    %976 = vmatpush.xpose.msra.mxu0 %v960
    %977 = vmatpush.xpose.msra.mxu0 %v958
    %978 = vmatmul.f32.gmra.mxu0 %v954
    %v979 = vpop.f32.mrf.mxu0
    %v980 = vadd.f32 0.0, %v979
    %981 = vmatmul.f32.gmra.mxu0 %v956
    %v982 = vpop.f32.mrf.mxu0
    %v983 = vadd.f32 0.0, %v982
    %984 = vdwg.mxu0
    %985 = vrot.lane.b32.xlu0 %v104, 32
    %v986 = vpop.permute.xlu0 %985
    %987 = vrot.lane.b32.xlu0 %v107, 32
    %v988 = vpop.permute.xlu0 %987
    %989 = vrot.lane.b32.xlu0 %v153, 32
    %v990 = vpop.permute.xlu0 %989
    %991 = vrot.lane.b32.xlu0 %v156, 32
    %v992 = vpop.permute.xlu0 %991
    %v993 = vsel %vm219, %v986, 0
    %v995 = vsel %vm219, %v988, 0
    %v997 = vsel %vm219, %v990, 0
    %v999 = vsel %vm219, %v992, 0
    %1001 = vmatpush.xpose.msra.mxu0 0.0
    %1002 = vmatpush.xpose.msra.mxu0 0.0
    %1003 = vmatpush.xpose.msra.mxu0 0.0
    %1004 = vmatpush.xpose.msra.mxu0 0.0
    %1005 = vmatpush.xpose.msra.mxu0 0.0
    %1006 = vmatpush.xpose.msra.mxu0 0.0
    %1007 = vmatpush.xpose.msra.mxu0 0.0
    %1008 = vmatpush.xpose.msra.mxu0 0.0
    %1009 = vmatpush.xpose.msra.mxu0 0.0
    %1010 = vmatpush.xpose.msra.mxu0 0.0
    %1011 = vmatpush.xpose.msra.mxu0 0.0
    %1012 = vmatpush.xpose.msra.mxu0 0.0
    %1013 = vmatpush.xpose.msra.mxu0 0.0
    %1014 = vmatpush.xpose.msra.mxu0 0.0
    %1015 = vmatpush.xpose.msra.mxu0 %v999
    %1016 = vmatpush.xpose.msra.mxu0 %v997
    %1017 = vmatmul.f32.gmra.mxu0 %v993
    %v1018 = vpop.f32.mrf.mxu0
    %v1019 = vadd.f32 0.0, %v1018
    %1020 = vmatmul.f32.gmra.mxu0 %v995
    %v1021 = vpop.f32.mrf.mxu0
    %v1022 = vadd.f32 0.0, %v1021
    %1023 = vdwg.mxu0
    %v1024 = vmul.f32 %v980, 0.17677669
    %v1025 = vmul.f32 %v983, 0.17677669
    %v1026 = vmul.f32 %v1019, 0.17677669
    %v1027 = vmul.f32 %v1022, 0.17677669
    %v1028 = vsub.f32 %v1024, %v294
    %v1029 = vsub.f32 %v1025, %v294
    %v1030 = vsub.f32 %v1026, %v295
    %v1031 = vsub.f32 %v1027, %v295
    %v1032 = vsel %vm300, %v1028, -inf
    %1033 = vmax.xlane.f32.xlu0 %v1032
    %v1034 = vpop.xlane.xlu0 %1033
    %v1035 = vsel %vm300, %v1029, -inf
    %1036 = vmax.xlane.f32.xlu0 %v1035
    %v1037 = vpop.xlane.xlu0 %1036
    %v1038 = vsel %vm300, %v1030, -inf
    %1039 = vmax.xlane.f32.xlu0 %v1038
    %v1040 = vpop.xlane.xlu0 %1039
    %v1041 = vsel %vm300, %v1031, -inf
    %1042 = vmax.xlane.f32.xlu0 %v1041
    %v1043 = vpop.xlane.xlu0 %1042
    %v1044 = vsub.f32 %v1028, %v1034
    %v1045 = vsub.f32 %v1029, %v1037
    %v1046 = vsub.f32 %v1030, %v1040
    %v1047 = vsub.f32 %v1031, %v1043
    %v1048 = vmul.f32 %v1044, 1.442695
    %v1049 = vpow.pop %v1048
    %v1050 = vmul.f32 %v1045, 1.442695
    %v1051 = vpow.pop %v1050
    %v1052 = vmul.f32 %v1046, 1.442695
    %v1053 = vpow.pop %v1052
    %v1054 = vmul.f32 %v1047, 1.442695
    %v1055 = vpow.pop %v1054
    %v1056 = vsel %vm300, %v1049, 0.0
    %1057 = vadd.xlane.f32.xlu0 %v1056
    %v1058 = vpop.xlane.xlu0 %1057
    %v1059 = vsel %vm300, %v1051, 0.0
    %1060 = vadd.xlane.f32.xlu0 %v1059
    %v1061 = vpop.xlane.xlu0 %1060
    %v1062 = vsel %vm300, %v1053, 0.0
    %1063 = vadd.xlane.f32.xlu0 %v1062
    %v1064 = vpop.xlane.xlu0 %1063
    %v1065 = vsel %vm300, %v1055, 0.0
    %1066 = vadd.xlane.f32.xlu0 %v1065
    %v1067 = vpop.xlane.xlu0 %1066
    %v1068 = vrcp.pop %v1058
    %v1069 = vrcp.pop %v1061
    %v1070 = vrcp.pop %v1064
    %v1071 = vrcp.pop %v1067
    %v1072 = vmul.f32 %v1049, %v1068
    %v1073 = vmul.f32 %v1051, %v1069
    %v1074 = vmul.f32 %v1053, %v1070
    %v1075 = vmul.f32 %v1055, %v1071
    %1076 = vrot.lane.b32.xlu0 %v196, 32
    %v1077 = vpop.permute.xlu0 %1076
    %1078 = vrot.lane.b32.xlu0 %v199, 32
    %v1079 = vpop.permute.xlu0 %1078
    %v1083 = vsel %vm300, %v1072, 0
    %v1086 = vsel %vm300, %v1073, 0
    %1088 = vmatpush.msra.mxu0 0.0
    %1089 = vmatpush.msra.mxu0 0.0
    %1090 = vmatpush.msra.mxu0 0.0
    %1091 = vmatpush.msra.mxu0 0.0
    %1092 = vmatpush.msra.mxu0 0.0
    %1093 = vmatpush.msra.mxu0 0.0
    %1094 = vmatpush.msra.mxu0 0.0
    %1095 = vmatpush.msra.mxu0 0.0
    %1096 = vmatpush.msra.mxu0 0.0
    %1097 = vmatpush.msra.mxu0 0.0
    %1098 = vmatpush.msra.mxu0 0.0
    %1099 = vmatpush.msra.mxu0 0.0
    %1100 = vmatpush.msra.mxu0 0.0
    %1101 = vmatpush.msra.mxu0 0.0
    %1102 = vmatpush.msra.mxu0 %v1079
    %1103 = vmatpush.msra.mxu0 %v1077
    %1104 = vmatmul.f32.gmra.mxu0 %v1083
    %v1105 = vpop.f32.mrf.mxu0
    %v1106 = vadd.f32 0.0, %v1105
    %1107 = vmatmul.f32.gmra.mxu0 %v1086
    %v1108 = vpop.f32.mrf.mxu0
    %v1109 = vadd.f32 0.0, %v1108
    %1110 = vdwg.mxu0
    %1111 = vrot.lane.b32.xlu0 %v202, 32
    %v1112 = vpop.permute.xlu0 %1111
    %1113 = vrot.lane.b32.xlu0 %v205, 32
    %v1114 = vpop.permute.xlu0 %1113
    %v1118 = vsel %vm300, %v1074, 0
    %v1121 = vsel %vm300, %v1075, 0
    %1123 = vmatpush.msra.mxu0 0.0
    %1124 = vmatpush.msra.mxu0 0.0
    %1125 = vmatpush.msra.mxu0 0.0
    %1126 = vmatpush.msra.mxu0 0.0
    %1127 = vmatpush.msra.mxu0 0.0
    %1128 = vmatpush.msra.mxu0 0.0
    %1129 = vmatpush.msra.mxu0 0.0
    %1130 = vmatpush.msra.mxu0 0.0
    %1131 = vmatpush.msra.mxu0 0.0
    %1132 = vmatpush.msra.mxu0 0.0
    %1133 = vmatpush.msra.mxu0 0.0
    %1134 = vmatpush.msra.mxu0 0.0
    %1135 = vmatpush.msra.mxu0 0.0
    %1136 = vmatpush.msra.mxu0 0.0
    %1137 = vmatpush.msra.mxu0 %v1114
    %1138 = vmatpush.msra.mxu0 %v1112
    %1139 = vmatmul.f32.gmra.mxu0 %v1118
    %v1140 = vpop.f32.mrf.mxu0
    %v1141 = vadd.f32 0.0, %v1140
    %1142 = vmatmul.f32.gmra.mxu0 %v1121
    %v1143 = vpop.f32.mrf.mxu0
    %v1144 = vadd.f32 0.0, %v1143
    %1145 = vdwg.mxu0
    %v1146 = vld [vmem:[%s7 + $0x60] sm:$0xff]
    %v1147 = vld [vmem:[%s7 + $0x68] sm:$0xff]
    %v1148 = vld [vmem:[%s7 + $0x70] sm:$0xff]
    %v1149 = vld [vmem:[%s7 + $0x78] sm:$0xff]
    %v1151 = vsel %vm219, %v1106, 0
    %v1154 = vsel %vm219, %v1109, 0
    %v1157 = vsel %vm219, %v1141, 0
    %v1160 = vsel %vm219, %v1144, 0
    %1162 = vmatpush.msra.mxu0 0.0
    %1163 = vmatpush.msra.mxu0 0.0
    %1164 = vmatpush.msra.mxu0 0.0
    %1165 = vmatpush.msra.mxu0 0.0
    %1166 = vmatpush.msra.mxu0 0.0
    %1167 = vmatpush.msra.mxu0 0.0
    %1168 = vmatpush.msra.mxu0 0.0
    %1169 = vmatpush.msra.mxu0 0.0
    %1170 = vmatpush.msra.mxu0 0.0
    %1171 = vmatpush.msra.mxu0 0.0
    %1172 = vmatpush.msra.mxu0 0.0
    %1173 = vmatpush.msra.mxu0 0.0
    %1174 = vmatpush.msra.mxu0 %v1149
    %1175 = vmatpush.msra.mxu0 %v1148
    %1176 = vmatpush.msra.mxu0 %v1147
    %1177 = vmatpush.msra.mxu0 %v1146
    %1178 = vmatmul.f32.gmra.mxu0 %v1151
    %v1179 = vpop.f32.mrf.mxu0
    %v1180 = vadd.f32 0.0, %v1179
    %1181 = vmatmul.f32.gmra.mxu0 %v1154
    %v1182 = vpop.f32.mrf.mxu0
    %v1183 = vadd.f32 0.0, %v1182
    %1184 = vmatmul.f32.gmra.mxu0 %v1157
    %v1185 = vpop.f32.mrf.mxu0
    %v1186 = vadd.f32 0.0, %v1185
    %1187 = vmatmul.f32.gmra.mxu0 %v1160
    %v1188 = vpop.f32.mrf.mxu0
    %v1189 = vadd.f32 0.0, %v1188
    %1190 = vdwg.mxu0
    %v1191 = vadd.f32 %v942, %v1180
    %v1192 = vadd.f32 %v943, %v1183
    %v1193 = vadd.f32 %v944, %v1186
    %v1194 = vadd.f32 %v945, %v1189
    %v1195 = vadd.f32 %v1191, %v60
    %v1196 = vadd.f32 %v1192, %v61
    %v1197 = vadd.f32 %v1193, %v62
    %v1198 = vadd.f32 %v1194, %v63
    %1199 = vadd.xlane.f32.xlu0 %v1195
    %v1200 = vpop.xlane.xlu0 %1199
    %1201 = vadd.xlane.f32.xlu0 %v1196
    %v1202 = vpop.xlane.xlu0 %1201
    %1203 = vadd.xlane.f32.xlu0 %v1197
    %v1204 = vpop.xlane.xlu0 %1203
    %1205 = vadd.xlane.f32.xlu0 %v1198
    %v1206 = vpop.xlane.xlu0 %1205
    %v1207 = vrcp.pop 128.0
    %v1208 = vmul.f32 128.0, %v1207
    %v1209 = vsub.f32 1.0, %v1208
    %v1210 = vmul.f32 %v1207, %v1209
    %v1211 = vadd.f32 %v1207, %v1210
    %vm1212 = vweird.f32 %v1207
    %v1213 = vsel %vm1212, %v1207, %v1211
    %v1214 = vmul.f32 %v1200, %v1213
    %v1215 = vmul.f32 %v1202, %v1213
    %v1216 = vmul.f32 %v1204, %v1213
    %v1217 = vmul.f32 %v1206, %v1213
    %v1218 = vsub.f32 %v1195, %v1214
    %v1219 = vsub.f32 %v1196, %v1215
    %v1220 = vsub.f32 %v1197, %v1216
    %v1221 = vsub.f32 %v1198, %v1217
    %v1222 = vmul.f32 %v1218, %v1218
    %v1223 = vmul.f32 %v1219, %v1219
    %v1224 = vmul.f32 %v1220, %v1220
    %v1225 = vmul.f32 %v1221, %v1221
    %1226 = vadd.xlane.f32.xlu0 %v1222
    %v1227 = vpop.xlane.xlu0 %1226
    %1228 = vadd.xlane.f32.xlu0 %v1223
    %v1229 = vpop.xlane.xlu0 %1228
    %1230 = vadd.xlane.f32.xlu0 %v1224
    %v1231 = vpop.xlane.xlu0 %1230
    %1232 = vadd.xlane.f32.xlu0 %v1225
    %v1233 = vpop.xlane.xlu0 %1232
    %v1234 = vmul.f32 %v1227, %v1213
    %v1235 = vmul.f32 %v1229, %v1213
    %v1236 = vmul.f32 %v1231, %v1213
    %v1237 = vmul.f32 %v1233, %v1213
    %v1238 = vld [vmem:[%s12] sm:$0x1]
    %v1239 = vadd.f32 %v1234, 1e-05
    %v1240 = vadd.f32 %v1235, 1e-05
    %v1241 = vadd.f32 %v1236, 1e-05
    %v1242 = vadd.f32 %v1237, 1e-05
    %v1243 = vrsqrt.pop %v1239
    %v1244 = vmul.f32 %v1243, %v1239
    %v1245 = vmul.f32 %v1244, %v1243
    %v1246 = vmul.f32 0.5, %v1245
    %v1247 = vsub.f32 1.5, %v1246
    %v1248 = vmul.f32 %v1243, %v1247
    %vm1249 = vweird.f32 %v1239
    %vm1250 = vweird.f32 %v1243
    %vm1251 = vmor %vm1249, %vm1250
    %v1252 = vsel %vm1251, %v1243, %v1248
    %v1253 = vrsqrt.pop %v1240
    %v1254 = vmul.f32 %v1253, %v1240
    %v1255 = vmul.f32 %v1254, %v1253
    %v1256 = vmul.f32 0.5, %v1255
    %v1257 = vsub.f32 1.5, %v1256
    %v1258 = vmul.f32 %v1253, %v1257
    %vm1259 = vweird.f32 %v1240
    %vm1260 = vweird.f32 %v1253
    %vm1261 = vmor %vm1259, %vm1260
    %v1262 = vsel %vm1261, %v1253, %v1258
    %v1263 = vrsqrt.pop %v1241
    %v1264 = vmul.f32 %v1263, %v1241
    %v1265 = vmul.f32 %v1264, %v1263
    %v1266 = vmul.f32 0.5, %v1265
    %v1267 = vsub.f32 1.5, %v1266
    %v1268 = vmul.f32 %v1263, %v1267
    %vm1269 = vweird.f32 %v1241
    %vm1270 = vweird.f32 %v1263
    %vm1271 = vmor %vm1269, %vm1270
    %v1272 = vsel %vm1271, %v1263, %v1268
    %v1273 = vrsqrt.pop %v1242
    %v1274 = vmul.f32 %v1273, %v1242
    %v1275 = vmul.f32 %v1274, %v1273
    %v1276 = vmul.f32 0.5, %v1275
    %v1277 = vsub.f32 1.5, %v1276
    %v1278 = vmul.f32 %v1273, %v1277
    %vm1279 = vweird.f32 %v1242
    %vm1280 = vweird.f32 %v1273
    %vm1281 = vmor %vm1279, %vm1280
    %v1282 = vsel %vm1281, %v1273, %v1278
    %v1283 = vmul.f32 %v1218, %v1252
    %v1284 = vmul.f32 %v1219, %v1262
    %v1285 = vmul.f32 %v1220, %v1272
    %v1286 = vmul.f32 %v1221, %v1282
    %v1288 = vperm.slane %v1238, 0
    %v1290 = vmul.f32 %v1288, %v1283
    %v1291 = vmul.f32 %v1288, %v1284
    %v1292 = vmul.f32 %v1288, %v1285
    %v1293 = vmul.f32 %v1288, %v1286
    %v1294 = vld [vmem:[%s13] sm:$0x1]
    %v1296 = vperm.slane %v1294, 0
    %v1298 = vadd.f32 %v1290, %v1296
    %v1299 = vadd.f32 %v1291, %v1296
    %v1300 = vadd.f32 %v1292, %v1296
    %v1301 = vadd.f32 %v1293, %v1296
    %v1302 = vld [vmem:[%s8] sm:$0xff]
    %v1303 = vld [vmem:[%s8 + $0x8] sm:$0xff]
    %v1304 = vld [vmem:[%s8 + $0x10] sm:$0xff]
    %v1305 = vld [vmem:[%s8 + $0x18] sm:$0xff]
    %v1306 = vld [vmem:[%s8 + $0x20] sm:$0xff]
    %v1307 = vld [vmem:[%s8 + $0x28] sm:$0xff]
    %v1308 = vld [vmem:[%s8 + $0x30] sm:$0xff]
    %v1309 = vld [vmem:[%s8 + $0x38] sm:$0xff]
    %v1310 = vld [vmem:[%s8 + $0x40] sm:$0xff]
    %v1311 = vld [vmem:[%s8 + $0x48] sm:$0xff]
    %v1312 = vld [vmem:[%s8 + $0x50] sm:$0xff]
    %v1313 = vld [vmem:[%s8 + $0x58] sm:$0xff]
    %v1314 = vld [vmem:[%s8 + $0x60] sm:$0xff]
    %v1315 = vld [vmem:[%s8 + $0x68] sm:$0xff]
    %v1316 = vld [vmem:[%s8 + $0x70] sm:$0xff]
    %v1317 = vld [vmem:[%s8 + $0x78] sm:$0xff]
    %v1318 = vld [vmem:[%s8 + $0x80] sm:$0xff]
    %v1319 = vld [vmem:[%s8 + $0x88] sm:$0xff]
    %v1320 = vld [vmem:[%s8 + $0x90] sm:$0xff]
    %v1321 = vld [vmem:[%s8 + $0x98] sm:$0xff]
    %v1322 = vld [vmem:[%s8 + $0xa0] sm:$0xff]
    %v1323 = vld [vmem:[%s8 + $0xa8] sm:$0xff]
    %v1324 = vld [vmem:[%s8 + $0xb0] sm:$0xff]
    %v1325 = vld [vmem:[%s8 + $0xb8] sm:$0xff]
    %v1326 = vld [vmem:[%s8 + $0xc0] sm:$0xff]
    %v1327 = vld [vmem:[%s8 + $0xc8] sm:$0xff]
    %v1328 = vld [vmem:[%s8 + $0xd0] sm:$0xff]
    %v1329 = vld [vmem:[%s8 + $0xd8] sm:$0xff]
    %v1330 = vld [vmem:[%s8 + $0xe0] sm:$0xff]
    %v1331 = vld [vmem:[%s8 + $0xe8] sm:$0xff]
    %v1332 = vld [vmem:[%s8 + $0xf0] sm:$0xff]
    %v1333 = vld [vmem:[%s8 + $0xf8] sm:$0xff]
    %v1334 = vld [vmem:[%s8 + $0x100] sm:$0xff]
    %v1335 = vld [vmem:[%s8 + $0x108] sm:$0xff]
    %v1336 = vld [vmem:[%s8 + $0x110] sm:$0xff]
    %v1337 = vld [vmem:[%s8 + $0x118] sm:$0xff]
    %v1338 = vld [vmem:[%s8 + $0x120] sm:$0xff]
    %v1339 = vld [vmem:[%s8 + $0x128] sm:$0xff]
    %v1340 = vld [vmem:[%s8 + $0x130] sm:$0xff]
    %v1341 = vld [vmem:[%s8 + $0x138] sm:$0xff]
    %v1342 = vld [vmem:[%s8 + $0x140] sm:$0xff]
    %v1343 = vld [vmem:[%s8 + $0x148] sm:$0xff]
    %v1344 = vld [vmem:[%s8 + $0x150] sm:$0xff]
    %v1345 = vld [vmem:[%s8 + $0x158] sm:$0xff]
    %v1346 = vld [vmem:[%s8 + $0x160] sm:$0xff]
    %v1347 = vld [vmem:[%s8 + $0x168] sm:$0xff]
    %v1348 = vld [vmem:[%s8 + $0x170] sm:$0xff]
    %v1349 = vld [vmem:[%s8 + $0x178] sm:$0xff]
    %v1350 = vld [vmem:[%s8 + $0x180] sm:$0xff]
    %v1351 = vld [vmem:[%s8 + $0x188] sm:$0xff]
    %v1352 = vld [vmem:[%s8 + $0x190] sm:$0xff]
    %v1353 = vld [vmem:[%s8 + $0x198] sm:$0xff]
    %v1354 = vld [vmem:[%s8 + $0x1a0] sm:$0xff]
    %v1355 = vld [vmem:[%s8 + $0x1a8] sm:$0xff]
    %v1356 = vld [vmem:[%s8 + $0x1b0] sm:$0xff]
    %v1357 = vld [vmem:[%s8 + $0x1b8] sm:$0xff]
    %v1358 = vld [vmem:[%s8 + $0x1c0] sm:$0xff]
    %v1359 = vld [vmem:[%s8 + $0x1c8] sm:$0xff]
    %v1360 = vld [vmem:[%s8 + $0x1d0] sm:$0xff]
    %v1361 = vld [vmem:[%s8 + $0x1d8] sm:$0xff]
    %v1362 = vld [vmem:[%s8 + $0x1e0] sm:$0xff]
    %v1363 = vld [vmem:[%s8 + $0x1e8] sm:$0xff]
    %v1364 = vld [vmem:[%s8 + $0x1f0] sm:$0xff]
    %v1365 = vld [vmem:[%s8 + $0x1f8] sm:$0xff]
    %v1366 = vld [vmem:[%s9] sm:$0xf]
    %v1368 = vperm.slane %v1366, 0
    %v1369 = vperm.slane %v1366, 1
    %v1370 = vperm.slane %v1366, 2
    %v1371 = vperm.slane %v1366, 3
    %1376 = vmatpush.msra.mxu0 %v1362
    %1377 = vmatpush.msra.mxu0 %v1358
    %1378 = vmatpush.msra.mxu0 %v1354
    %1379 = vmatpush.msra.mxu0 %v1350
    %1380 = vmatpush.msra.mxu0 %v1346
    %1381 = vmatpush.msra.mxu0 %v1342
    %1382 = vmatpush.msra.mxu0 %v1338
    %1383 = vmatpush.msra.mxu0 %v1334
    %1384 = vmatpush.msra.mxu0 %v1330
    %1385 = vmatpush.msra.mxu0 %v1326
    %1386 = vmatpush.msra.mxu0 %v1322
    %1387 = vmatpush.msra.mxu0 %v1318
    %1388 = vmatpush.msra.mxu0 %v1314
    %1389 = vmatpush.msra.mxu0 %v1310
    %1390 = vmatpush.msra.mxu0 %v1306
    %1391 = vmatpush.msra.mxu0 %v1302
    %1392 = vmatmul.f32.gmra.mxu0 %v1298
    %v1393 = vpop.f32.mrf.mxu0
    %v1394 = vadd.f32 %v1368, %v1393
    %1395 = vmatmul.f32.gmra.mxu0 %v1299
    %v1396 = vpop.f32.mrf.mxu0
    %v1397 = vadd.f32 %v1368, %v1396
    %1398 = vmatmul.f32.gmra.mxu0 %v1300
    %v1399 = vpop.f32.mrf.mxu0
    %v1400 = vadd.f32 %v1368, %v1399
    %1401 = vmatmul.f32.gmra.mxu0 %v1301
    %v1402 = vpop.f32.mrf.mxu0
    %v1403 = vadd.f32 %v1368, %v1402
    %1404 = vdwg.mxu0
    %1405 = vmatpush.msra.mxu0 %v1363
    %1406 = vmatpush.msra.mxu0 %v1359
    %1407 = vmatpush.msra.mxu0 %v1355
    %1408 = vmatpush.msra.mxu0 %v1351
    %1409 = vmatpush.msra.mxu0 %v1347
    %1410 = vmatpush.msra.mxu0 %v1343
    %1411 = vmatpush.msra.mxu0 %v1339
    %1412 = vmatpush.msra.mxu0 %v1335
    %1413 = vmatpush.msra.mxu0 %v1331
    %1414 = vmatpush.msra.mxu0 %v1327
    %1415 = vmatpush.msra.mxu0 %v1323
    %1416 = vmatpush.msra.mxu0 %v1319
    %1417 = vmatpush.msra.mxu0 %v1315
    %1418 = vmatpush.msra.mxu0 %v1311
    %1419 = vmatpush.msra.mxu0 %v1307
    %1420 = vmatpush.msra.mxu0 %v1303
    %1421 = vmatmul.f32.gmra.mxu0 %v1298
    %v1422 = vpop.f32.mrf.mxu0
    %v1423 = vadd.f32 %v1369, %v1422
    %1424 = vmatmul.f32.gmra.mxu0 %v1299
    %v1425 = vpop.f32.mrf.mxu0
    %v1426 = vadd.f32 %v1369, %v1425
    %1427 = vmatmul.f32.gmra.mxu0 %v1300
    %v1428 = vpop.f32.mrf.mxu0
    %v1429 = vadd.f32 %v1369, %v1428
    %1430 = vmatmul.f32.gmra.mxu0 %v1301
    %v1431 = vpop.f32.mrf.mxu0
    %v1432 = vadd.f32 %v1369, %v1431
    %1433 = vdwg.mxu0
    %1434 = vmatpush.msra.mxu0 %v1364
    %1435 = vmatpush.msra.mxu0 %v1360
    %1436 = vmatpush.msra.mxu0 %v1356
    %1437 = vmatpush.msra.mxu0 %v1352
    %1438 = vmatpush.msra.mxu0 %v1348
    %1439 = vmatpush.msra.mxu0 %v1344
    %1440 = vmatpush.msra.mxu0 %v1340
    %1441 = vmatpush.msra.mxu0 %v1336
    %1442 = vmatpush.msra.mxu0 %v1332
    %1443 = vmatpush.msra.mxu0 %v1328
    %1444 = vmatpush.msra.mxu0 %v1324
    %1445 = vmatpush.msra.mxu0 %v1320
    %1446 = vmatpush.msra.mxu0 %v1316
    %1447 = vmatpush.msra.mxu0 %v1312
    %1448 = vmatpush.msra.mxu0 %v1308
    %1449 = vmatpush.msra.mxu0 %v1304
    %1450 = vmatmul.f32.gmra.mxu0 %v1298
    %v1451 = vpop.f32.mrf.mxu0
    %v1452 = vadd.f32 %v1370, %v1451
    %1453 = vmatmul.f32.gmra.mxu0 %v1299
    %v1454 = vpop.f32.mrf.mxu0
    %v1455 = vadd.f32 %v1370, %v1454
    %1456 = vmatmul.f32.gmra.mxu0 %v1300
    %v1457 = vpop.f32.mrf.mxu0
    %v1458 = vadd.f32 %v1370, %v1457
    %1459 = vmatmul.f32.gmra.mxu0 %v1301
    %v1460 = vpop.f32.mrf.mxu0
    %v1461 = vadd.f32 %v1370, %v1460
    %1462 = vdwg.mxu0
    %1463 = vmatpush.msra.mxu0 %v1365
    %1464 = vmatpush.msra.mxu0 %v1361
    %1465 = vmatpush.msra.mxu0 %v1357
    %1466 = vmatpush.msra.mxu0 %v1353
    %1467 = vmatpush.msra.mxu0 %v1349
    %1468 = vmatpush.msra.mxu0 %v1345
    %1469 = vmatpush.msra.mxu0 %v1341
    %1470 = vmatpush.msra.mxu0 %v1337
    %1471 = vmatpush.msra.mxu0 %v1333
    %1472 = vmatpush.msra.mxu0 %v1329
    %1473 = vmatpush.msra.mxu0 %v1325
    %1474 = vmatpush.msra.mxu0 %v1321
    %1475 = vmatpush.msra.mxu0 %v1317
    %1476 = vmatpush.msra.mxu0 %v1313
    %1477 = vmatpush.msra.mxu0 %v1309
    %1478 = vmatpush.msra.mxu0 %v1305
    %1479 = vmatmul.f32.gmra.mxu0 %v1298
    %v1480 = vpop.f32.mrf.mxu0
    %v1481 = vadd.f32 %v1371, %v1480
    %1482 = vmatmul.f32.gmra.mxu0 %v1299
    %v1483 = vpop.f32.mrf.mxu0
    %v1484 = vadd.f32 %v1371, %v1483
    %1485 = vmatmul.f32.gmra.mxu0 %v1300
    %v1486 = vpop.f32.mrf.mxu0
    %v1487 = vadd.f32 %v1371, %v1486
    %1488 = vmatmul.f32.gmra.mxu0 %v1301
    %v1489 = vpop.f32.mrf.mxu0
    %v1490 = vadd.f32 %v1371, %v1489
    %1491 = vdwg.mxu0
    %v1492 = vmax.f32 %v1394, 0.0
    %v1493 = vmax.f32 %v1423, 0.0
    %v1494 = vmax.f32 %v1452, 0.0
    %v1495 = vmax.f32 %v1481, 0.0
    %v1496 = vmax.f32 %v1397, 0.0
    %v1497 = vmax.f32 %v1426, 0.0
    %v1498 = vmax.f32 %v1455, 0.0
    %v1499 = vmax.f32 %v1484, 0.0
    %v1500 = vmax.f32 %v1400, 0.0
    %v1501 = vmax.f32 %v1429, 0.0
    %v1502 = vmax.f32 %v1458, 0.0
    %v1503 = vmax.f32 %v1487, 0.0
    %v1504 = vmax.f32 %v1403, 0.0
    %v1505 = vmax.f32 %v1432, 0.0
    %v1506 = vmax.f32 %v1461, 0.0
    %v1507 = vmax.f32 %v1490, 0.0
    %v1508 = vld [vmem:[%s10] sm:$0xff]
    %v1509 = vld [vmem:[%s10 + $0x8] sm:$0xff]
    %v1510 = vld [vmem:[%s10 + $0x10] sm:$0xff]
    %v1511 = vld [vmem:[%s10 + $0x18] sm:$0xff]
    %v1512 = vld [vmem:[%s10 + $0x20] sm:$0xff]
    %v1513 = vld [vmem:[%s10 + $0x28] sm:$0xff]
    %v1514 = vld [vmem:[%s10 + $0x30] sm:$0xff]
    %v1515 = vld [vmem:[%s10 + $0x38] sm:$0xff]
    %v1516 = vld [vmem:[%s10 + $0x40] sm:$0xff]
    %v1517 = vld [vmem:[%s10 + $0x48] sm:$0xff]
    %v1518 = vld [vmem:[%s10 + $0x50] sm:$0xff]
    %v1519 = vld [vmem:[%s10 + $0x58] sm:$0xff]
    %v1520 = vld [vmem:[%s10 + $0x60] sm:$0xff]
    %v1521 = vld [vmem:[%s10 + $0x68] sm:$0xff]
    %v1522 = vld [vmem:[%s10 + $0x70] sm:$0xff]
    %v1523 = vld [vmem:[%s10 + $0x78] sm:$0xff]
    %v1524 = vld [vmem:[%s10 + $0x80] sm:$0xff]
    %v1525 = vld [vmem:[%s10 + $0x88] sm:$0xff]
    %v1526 = vld [vmem:[%s10 + $0x90] sm:$0xff]
    %v1527 = vld [vmem:[%s10 + $0x98] sm:$0xff]
    %v1528 = vld [vmem:[%s10 + $0xa0] sm:$0xff]
    %v1529 = vld [vmem:[%s10 + $0xa8] sm:$0xff]
    %v1530 = vld [vmem:[%s10 + $0xb0] sm:$0xff]
    %v1531 = vld [vmem:[%s10 + $0xb8] sm:$0xff]
    %v1532 = vld [vmem:[%s10 + $0xc0] sm:$0xff]
    %v1533 = vld [vmem:[%s10 + $0xc8] sm:$0xff]
    %v1534 = vld [vmem:[%s10 + $0xd0] sm:$0xff]
    %v1535 = vld [vmem:[%s10 + $0xd8] sm:$0xff]
    %v1536 = vld [vmem:[%s10 + $0xe0] sm:$0xff]
    %v1537 = vld [vmem:[%s10 + $0xe8] sm:$0xff]
    %v1538 = vld [vmem:[%s10 + $0xf0] sm:$0xff]
    %v1539 = vld [vmem:[%s10 + $0xf8] sm:$0xff]
    %v1540 = vld [vmem:[%s10 + $0x100] sm:$0xff]
    %v1541 = vld [vmem:[%s10 + $0x108] sm:$0xff]
    %v1542 = vld [vmem:[%s10 + $0x110] sm:$0xff]
    %v1543 = vld [vmem:[%s10 + $0x118] sm:$0xff]
    %v1544 = vld [vmem:[%s10 + $0x120] sm:$0xff]
    %v1545 = vld [vmem:[%s10 + $0x128] sm:$0xff]
    %v1546 = vld [vmem:[%s10 + $0x130] sm:$0xff]
    %v1547 = vld [vmem:[%s10 + $0x138] sm:$0xff]
    %v1548 = vld [vmem:[%s10 + $0x140] sm:$0xff]
    %v1549 = vld [vmem:[%s10 + $0x148] sm:$0xff]
    %v1550 = vld [vmem:[%s10 + $0x150] sm:$0xff]
    %v1551 = vld [vmem:[%s10 + $0x158] sm:$0xff]
    %v1552 = vld [vmem:[%s10 + $0x160] sm:$0xff]
    %v1553 = vld [vmem:[%s10 + $0x168] sm:$0xff]
    %v1554 = vld [vmem:[%s10 + $0x170] sm:$0xff]
    %v1555 = vld [vmem:[%s10 + $0x178] sm:$0xff]
    %v1556 = vld [vmem:[%s10 + $0x180] sm:$0xff]
    %v1557 = vld [vmem:[%s10 + $0x188] sm:$0xff]
    %v1558 = vld [vmem:[%s10 + $0x190] sm:$0xff]
    %v1559 = vld [vmem:[%s10 + $0x198] sm:$0xff]
    %v1560 = vld [vmem:[%s10 + $0x1a0] sm:$0xff]
    %v1561 = vld [vmem:[%s10 + $0x1a8] sm:$0xff]
    %v1562 = vld [vmem:[%s10 + $0x1b0] sm:$0xff]
    %v1563 = vld [vmem:[%s10 + $0x1b8] sm:$0xff]
    %v1564 = vld [vmem:[%s10 + $0x1c0] sm:$0xff]
    %v1565 = vld [vmem:[%s10 + $0x1c8] sm:$0xff]
    %v1566 = vld [vmem:[%s10 + $0x1d0] sm:$0xff]
    %v1567 = vld [vmem:[%s10 + $0x1d8] sm:$0xff]
    %v1568 = vld [vmem:[%s10 + $0x1e0] sm:$0xff]
    %v1569 = vld [vmem:[%s10 + $0x1e8] sm:$0xff]
    %v1570 = vld [vmem:[%s10 + $0x1f0] sm:$0xff]
    %v1571 = vld [vmem:[%s10 + $0x1f8] sm:$0xff]
    %v1572 = vld [vmem:[%s11] sm:$0x1]
    %v1574 = vperm.slane %v1572, 0
    %1576 = vmatpush.msra.mxu0 %v1523
    %1577 = vmatpush.msra.mxu0 %v1522
    %1578 = vmatpush.msra.mxu0 %v1521
    %1579 = vmatpush.msra.mxu0 %v1520
    %1580 = vmatpush.msra.mxu0 %v1519
    %1581 = vmatpush.msra.mxu0 %v1518
    %1582 = vmatpush.msra.mxu0 %v1517
    %1583 = vmatpush.msra.mxu0 %v1516
    %1584 = vmatpush.msra.mxu0 %v1515
    %1585 = vmatpush.msra.mxu0 %v1514
    %1586 = vmatpush.msra.mxu0 %v1513
    %1587 = vmatpush.msra.mxu0 %v1512
    %1588 = vmatpush.msra.mxu0 %v1511
    %1589 = vmatpush.msra.mxu0 %v1510
    %1590 = vmatpush.msra.mxu0 %v1509
    %1591 = vmatpush.msra.mxu0 %v1508
    %1592 = vmatmul.f32.gmra.mxu0 %v1492
    %v1593 = vpop.f32.mrf.mxu0
    %v1594 = vadd.f32 %v1574, %v1593
    %1595 = vmatmul.f32.gmra.mxu0 %v1496
    %v1596 = vpop.f32.mrf.mxu0
    %v1597 = vadd.f32 %v1574, %v1596
    %1598 = vmatmul.f32.gmra.mxu0 %v1500
    %v1599 = vpop.f32.mrf.mxu0
    %v1600 = vadd.f32 %v1574, %v1599
    %1601 = vmatmul.f32.gmra.mxu0 %v1504
    %v1602 = vpop.f32.mrf.mxu0
    %v1603 = vadd.f32 %v1574, %v1602
    %1604 = vdwg.mxu0
    %1605 = vmatpush.msra.mxu0 %v1539
    %1606 = vmatpush.msra.mxu0 %v1538
    %1607 = vmatpush.msra.mxu0 %v1537
    %1608 = vmatpush.msra.mxu0 %v1536
    %1609 = vmatpush.msra.mxu0 %v1535
    %1610 = vmatpush.msra.mxu0 %v1534
    %1611 = vmatpush.msra.mxu0 %v1533
    %1612 = vmatpush.msra.mxu0 %v1532
    %1613 = vmatpush.msra.mxu0 %v1531
    %1614 = vmatpush.msra.mxu0 %v1530
    %1615 = vmatpush.msra.mxu0 %v1529
    %1616 = vmatpush.msra.mxu0 %v1528
    %1617 = vmatpush.msra.mxu0 %v1527
    %1618 = vmatpush.msra.mxu0 %v1526
    %1619 = vmatpush.msra.mxu0 %v1525
    %1620 = vmatpush.msra.mxu0 %v1524
    %1621 = vmatmul.f32.gmra.mxu0 %v1493
    %v1622 = vpop.f32.mrf.mxu0
    %v1623 = vadd.f32 %v1594, %v1622
    %1624 = vmatmul.f32.gmra.mxu0 %v1497
    %v1625 = vpop.f32.mrf.mxu0
    %v1626 = vadd.f32 %v1597, %v1625
    %1627 = vmatmul.f32.gmra.mxu0 %v1501
    %v1628 = vpop.f32.mrf.mxu0
    %v1629 = vadd.f32 %v1600, %v1628
    %1630 = vmatmul.f32.gmra.mxu0 %v1505
    %v1631 = vpop.f32.mrf.mxu0
    %v1632 = vadd.f32 %v1603, %v1631
    %1633 = vdwg.mxu0
    %1634 = vmatpush.msra.mxu0 %v1555
    %1635 = vmatpush.msra.mxu0 %v1554
    %1636 = vmatpush.msra.mxu0 %v1553
    %1637 = vmatpush.msra.mxu0 %v1552
    %1638 = vmatpush.msra.mxu0 %v1551
    %1639 = vmatpush.msra.mxu0 %v1550
    %1640 = vmatpush.msra.mxu0 %v1549
    %1641 = vmatpush.msra.mxu0 %v1548
    %1642 = vmatpush.msra.mxu0 %v1547
    %1643 = vmatpush.msra.mxu0 %v1546
    %1644 = vmatpush.msra.mxu0 %v1545
    %1645 = vmatpush.msra.mxu0 %v1544
    %1646 = vmatpush.msra.mxu0 %v1543
    %1647 = vmatpush.msra.mxu0 %v1542
    %1648 = vmatpush.msra.mxu0 %v1541
    %1649 = vmatpush.msra.mxu0 %v1540
    %1650 = vmatmul.f32.gmra.mxu0 %v1494
    %v1651 = vpop.f32.mrf.mxu0
    %v1652 = vadd.f32 %v1623, %v1651
    %1653 = vmatmul.f32.gmra.mxu0 %v1498
    %v1654 = vpop.f32.mrf.mxu0
    %v1655 = vadd.f32 %v1626, %v1654
    %1656 = vmatmul.f32.gmra.mxu0 %v1502
    %v1657 = vpop.f32.mrf.mxu0
    %v1658 = vadd.f32 %v1629, %v1657
    %1659 = vmatmul.f32.gmra.mxu0 %v1506
    %v1660 = vpop.f32.mrf.mxu0
    %v1661 = vadd.f32 %v1632, %v1660
    %1662 = vdwg.mxu0
    %1663 = vmatpush.msra.mxu0 %v1571
    %1664 = vmatpush.msra.mxu0 %v1570
    %1665 = vmatpush.msra.mxu0 %v1569
    %1666 = vmatpush.msra.mxu0 %v1568
    %1667 = vmatpush.msra.mxu0 %v1567
    %1668 = vmatpush.msra.mxu0 %v1566
    %1669 = vmatpush.msra.mxu0 %v1565
    %1670 = vmatpush.msra.mxu0 %v1564
    %1671 = vmatpush.msra.mxu0 %v1563
    %1672 = vmatpush.msra.mxu0 %v1562
    %1673 = vmatpush.msra.mxu0 %v1561
    %1674 = vmatpush.msra.mxu0 %v1560
    %1675 = vmatpush.msra.mxu0 %v1559
    %1676 = vmatpush.msra.mxu0 %v1558
    %1677 = vmatpush.msra.mxu0 %v1557
    %1678 = vmatpush.msra.mxu0 %v1556
    %1679 = vmatmul.f32.gmra.mxu0 %v1495
    %v1680 = vpop.f32.mrf.mxu0
    %v1681 = vadd.f32 %v1652, %v1680
    %1682 = vmatmul.f32.gmra.mxu0 %v1499
    %v1683 = vpop.f32.mrf.mxu0
    %v1684 = vadd.f32 %v1655, %v1683
    %1685 = vmatmul.f32.gmra.mxu0 %v1503
    %v1686 = vpop.f32.mrf.mxu0
    %v1687 = vadd.f32 %v1658, %v1686
    %1688 = vmatmul.f32.gmra.mxu0 %v1507
    %v1689 = vpop.f32.mrf.mxu0
    %v1690 = vadd.f32 %v1661, %v1689
    %1691 = vdwg.mxu0
    %v1692 = vadd.f32 %v1681, %v1298
    %v1693 = vadd.f32 %v1684, %v1299
    %v1694 = vadd.f32 %v1687, %v1300
    %v1695 = vadd.f32 %v1690, %v1301
    %1696 = vadd.xlane.f32.xlu0 %v1692
    %v1697 = vpop.xlane.xlu0 %1696
    %1698 = vadd.xlane.f32.xlu0 %v1693
    %v1699 = vpop.xlane.xlu0 %1698
    %1700 = vadd.xlane.f32.xlu0 %v1694
    %v1701 = vpop.xlane.xlu0 %1700
    %1702 = vadd.xlane.f32.xlu0 %v1695
    %v1703 = vpop.xlane.xlu0 %1702
    %v1704 = vmul.f32 %v1697, %v1213
    %v1705 = vmul.f32 %v1699, %v1213
    %v1706 = vmul.f32 %v1701, %v1213
    %v1707 = vmul.f32 %v1703, %v1213
    %v1708 = vsub.f32 %v1692, %v1704
    %v1709 = vsub.f32 %v1693, %v1705
    %v1710 = vsub.f32 %v1694, %v1706
    %v1711 = vsub.f32 %v1695, %v1707
    %v1712 = vmul.f32 %v1708, %v1708
    %v1713 = vmul.f32 %v1709, %v1709
    %v1714 = vmul.f32 %v1710, %v1710
    %v1715 = vmul.f32 %v1711, %v1711
    %1716 = vadd.xlane.f32.xlu0 %v1712
    %v1717 = vpop.xlane.xlu0 %1716
    %1718 = vadd.xlane.f32.xlu0 %v1713
    %v1719 = vpop.xlane.xlu0 %1718
    %1720 = vadd.xlane.f32.xlu0 %v1714
    %v1721 = vpop.xlane.xlu0 %1720
    %1722 = vadd.xlane.f32.xlu0 %v1715
    %v1723 = vpop.xlane.xlu0 %1722
    %v1724 = vmul.f32 %v1717, %v1213
    %v1725 = vmul.f32 %v1719, %v1213
    %v1726 = vmul.f32 %v1721, %v1213
    %v1727 = vmul.f32 %v1723, %v1213
    %v1728 = vld [vmem:[%s14] sm:$0x1]
    %v1729 = vadd.f32 %v1724, 1e-05
    %v1730 = vadd.f32 %v1725, 1e-05
    %v1731 = vadd.f32 %v1726, 1e-05
    %v1732 = vadd.f32 %v1727, 1e-05
    %v1733 = vrsqrt.pop %v1729
    %v1734 = vmul.f32 %v1733, %v1729
    %v1735 = vmul.f32 %v1734, %v1733
    %v1736 = vmul.f32 0.5, %v1735
    %v1737 = vsub.f32 1.5, %v1736
    %v1738 = vmul.f32 %v1733, %v1737
    %vm1739 = vweird.f32 %v1729
    %vm1740 = vweird.f32 %v1733
    %vm1741 = vmor %vm1739, %vm1740
    %v1742 = vsel %vm1741, %v1733, %v1738
    %v1743 = vrsqrt.pop %v1730
    %v1744 = vmul.f32 %v1743, %v1730
    %v1745 = vmul.f32 %v1744, %v1743
    %v1746 = vmul.f32 0.5, %v1745
    %v1747 = vsub.f32 1.5, %v1746
    %v1748 = vmul.f32 %v1743, %v1747
    %vm1749 = vweird.f32 %v1730
    %vm1750 = vweird.f32 %v1743
    %vm1751 = vmor %vm1749, %vm1750
    %v1752 = vsel %vm1751, %v1743, %v1748
    %v1753 = vrsqrt.pop %v1731
    %v1754 = vmul.f32 %v1753, %v1731
    %v1755 = vmul.f32 %v1754, %v1753
    %v1756 = vmul.f32 0.5, %v1755
    %v1757 = vsub.f32 1.5, %v1756
    %v1758 = vmul.f32 %v1753, %v1757
    %vm1759 = vweird.f32 %v1731
    %vm1760 = vweird.f32 %v1753
    %vm1761 = vmor %vm1759, %vm1760
    %v1762 = vsel %vm1761, %v1753, %v1758
    %v1763 = vrsqrt.pop %v1732
    %v1764 = vmul.f32 %v1763, %v1732
    %v1765 = vmul.f32 %v1764, %v1763
    %v1766 = vmul.f32 0.5, %v1765
    %v1767 = vsub.f32 1.5, %v1766
    %v1768 = vmul.f32 %v1763, %v1767
    %vm1769 = vweird.f32 %v1732
    %vm1770 = vweird.f32 %v1763
    %vm1771 = vmor %vm1769, %vm1770
    %v1772 = vsel %vm1771, %v1763, %v1768
    %v1773 = vmul.f32 %v1708, %v1742
    %v1774 = vmul.f32 %v1709, %v1752
    %v1775 = vmul.f32 %v1710, %v1762
    %v1776 = vmul.f32 %v1711, %v1772
    %v1778 = vperm.slane %v1728, 0
    %v1780 = vmul.f32 %v1778, %v1773
    %v1781 = vmul.f32 %v1778, %v1774
    %v1782 = vmul.f32 %v1778, %v1775
    %v1783 = vmul.f32 %v1778, %v1776
    %v1784 = vld [vmem:[%s15] sm:$0x1]
    %v1786 = vperm.slane %v1784, 0
    %v1788 = vadd.f32 %v1780, %v1786
    %v1789 = vadd.f32 %v1781, %v1786
    %v1790 = vadd.f32 %v1782, %v1786
    %v1791 = vadd.f32 %v1783, %v1786
    %1792 = vst [vmem:[#allocation4] sm:$0xff] %v1788
    %1793 = vst [vmem:[#allocation4 + $0x8] sm:$0xff] %v1789
    %1794 = vst [vmem:[#allocation4 + $0x10] sm:$0xff] %v1790
    %1795 = vst [vmem:[#allocation4 + $0x18] sm:$0xff] %v1791
    // Predicated region
    $region62: #{encoder_layer.1} parent=1 // pred_check
      _
    $region63: #{encoder_layer.1} parent=1 // pred_check_branch
      %1797 = sbr.rel (0) target = $region65
    $region64: #{encoder_layer.1} parent=1 // pred_region
      %1799 = vsyncadd [#allocation5], 0
      %s1800 = sshll.u32 [#allocation4], 4
      %s1801 = int_to_ptr.vmem [resolvable:$true] %s1800
      %s1802 = sshll.u32 %s16, 4
      %s1803 = int_to_ptr.hbm [resolvable:$true] %s1802
      %1808 = dma.vmem_to_hbm [thread:$0]  %s1801, 512, %s1803, [#allocation5], 128, 128, 8
    $region65: #{encoder_layer.1} parent=1 // pred_fallthru
      _
    // Predicated region
    $region66: #{encoder_layer.1} parent=1 // pred_check
      _
    $region67: #{encoder_layer.1} parent=1 // pred_check_branch
      %1810 = sbr.rel (0) target = $region69
    $region68: #{encoder_layer.1} parent=1 // pred_region
      %1812 = dma.done [#allocation5], 512
    $region69: #{encoder_layer.1} parent=1 // pred_fallthru
      _
    %1813 = vsyncpa [#allocation5], 1

</llo_original>
